<compile_context>
chip_gen: v5e
topology: v5e:2x2
jax: 0.10.0
libtpu: 0.0.40
codegen_flags: <defaults>
</compile_context>

<pallas_src>
import jax
import jax.numpy as jnp
import numpy as np
from jax import lax
from jax.experimental import pallas as pl
from jax.experimental.pallas import tpu as pltpu

EPS = 1e-5
LANE = 128


def _round_up(x, m):
    return (x + m - 1) // m * m


def _pad_last(a, target):
    pad = target - a.shape[-1]
    if pad == 0:
        return a
    return jnp.pad(a, [(0, 0)] * (a.ndim - 1) + [(0, pad)])


# --------------------------------------------------------------------------
# Kernel 1: fused  BN(scale/shift) -> ReLU -> Conv2d 3x3 (stride 1, pad 1)
#           (+ optional residual add), plus per-batch sum / sum-of-squares of
#           the output (so BN stats of the next layer need no extra HBM pass).
# One (H*W, C) x (C, Co) MXU dot per tap (9 total).
# --------------------------------------------------------------------------
def _conv3x3_body(x_ref, scale_ref, shift_ref, w_ref, res_ref, y_ref, stat_ref,
                  apad):
    H, W, C = x_ref.shape[1], x_ref.shape[2], x_ref.shape[3]
    Co = y_ref.shape[3]

    # BN + ReLU over the whole plane (VPU).
    a = jnp.maximum(x_ref[0] * scale_ref[...] + shift_ref[...], 0.0)

    # Zero only the 1-wide halo (cheap, and correct under "parallel" grid
    # scheduling where program_id(0)==0 may never run on a given core).
    apad[0:1, :, :] = jnp.zeros((1, W + 2, C), jnp.float32)
    apad[H + 1:H + 2, :, :] = jnp.zeros((1, W + 2, C), jnp.float32)
    apad[1:H + 1, 0:1, :] = jnp.zeros((H, 1, C), jnp.float32)
    apad[1:H + 1, W + 1:W + 2, :] = jnp.zeros((H, 1, C), jnp.float32)
    apad[1:H + 1, 1:W + 1, :] = a

    acc = jnp.zeros((H * W, Co), jnp.float32)
    for dh in range(3):
        for dw in range(3):
            patch = apad[dh:dh + H, dw:dw + W, :].reshape(H * W, C)
            acc = acc + jnp.dot(patch, w_ref[dh * 3 + dw],
                                preferred_element_type=jnp.float32)
    if res_ref is not None:
        acc = acc + res_ref[0].reshape(H * W, Co)

    y_ref[0] = acc.reshape(H, W, Co)
    # Fused BN statistics of the output (per-batch partial sums).
    stat_ref[0, 0:1, :] = jnp.sum(acc, axis=0, keepdims=True)
    stat_ref[0, 1:2, :] = jnp.sum(acc * acc, axis=0, keepdims=True)


def _conv3x3_kernel(x_ref, s_ref, b_ref, w_ref, y_ref, stat_ref, apad):
    _conv3x3_body(x_ref, s_ref, b_ref, w_ref, None, y_ref, stat_ref, apad)


def _conv3x3_res_kernel(x_ref, s_ref, b_ref, w_ref, r_ref, y_ref, stat_ref,
                        apad):
    _conv3x3_body(x_ref, s_ref, b_ref, w_ref, r_ref, y_ref, stat_ref, apad)


def bn_relu_conv3x3(x, scale, shift, w9, residual=None):
    """x: (N,H,W,C) channel-padded NHWC; w9: (9,C,Co); scale/shift: (1,1,C).

    Returns (y, stats) with stats[n, 0] = sum_hw y[n], stats[n, 1] = sum_hw y[n]^2.
    """
    N, H, W, C = x.shape
    Co = w9.shape[-1]
    in_specs = [
        pl.BlockSpec((1, H, W, C), lambda n: (n, 0, 0, 0)),
        pl.BlockSpec((1, 1, C), lambda n: (0, 0, 0)),
        pl.BlockSpec((1, 1, C), lambda n: (0, 0, 0)),
        pl.BlockSpec((9, C, Co), lambda n: (0, 0, 0)),
    ]
    args = [x, scale, shift, w9]
    kernel = _conv3x3_kernel
    if residual is not None:
        in_specs.append(pl.BlockSpec((1, H, W, Co), lambda n: (n, 0, 0, 0)))
        args.append(residual)
        kernel = _conv3x3_res_kernel
    y, stats = pl.pallas_call(
        kernel,
        out_shape=(jax.ShapeDtypeStruct((N, H, W, Co), jnp.float32),
                   jax.ShapeDtypeStruct((N, 2, Co), jnp.float32)),
        grid=(N,),
        in_specs=in_specs,
        out_specs=(pl.BlockSpec((1, H, W, Co), lambda n: (n, 0, 0, 0)),
                   pl.BlockSpec((1, 2, Co), lambda n: (n, 0, 0))),
        scratch_shapes=[pltpu.VMEM((H + 2, W + 2, C), jnp.float32)],
        compiler_params=pltpu.CompilerParams(
            dimension_semantics=("parallel",),
            vmem_limit_bytes=32 * 1024 * 1024),
    )(*args)
    return y, stats


# --------------------------------------------------------------------------
# Kernel 2: last-layer "tail":
#   BN2+ReLU(h) -> ConvTranspose2d 3x3 (stride 2, pad 1, out_pad 1)
#   + BN3+ReLU(x) -> ConvTranspose2d 1x1 (stride 2, out_pad 1)   (shortcut)
# Computed as 4 sub-pixel phase planes p = 2r + c (out[2m+r, 2n+c]); each phase
# is a sum of full-plane (H*W, C) x (C, Co) matmuls.  The interleave to
# (2H, 2W) happens in the wrapper, folded into the final NHWC->NCHW transpose.
# --------------------------------------------------------------------------
def _up_tail_kernel(h_ref, x_ref, s2_ref, b2_ref, s3_ref, b3_ref,
                    wt_ref, wsc_ref, o_ref, apad):
    H, W, C = h_ref.shape[1], h_ref.shape[2], h_ref.shape[3]
    Co = o_ref.shape[-1]

    # Main path activation with a zero bottom/right halo (out_pad = 1).
    a2 = jnp.maximum(h_ref[0] * s2_ref[...] + b2_ref[...], 0.0)
    apad[H:H + 1, :, :] = jnp.zeros((1, W + 1, C), jnp.float32)
    apad[0:H, W:W + 1, :] = jnp.zeros((H, 1, C), jnp.float32)
    apad[0:H, 0:W, :] = a2

    # 1x1 stride-2 shortcut: one full-plane matmul.
    a3 = jnp.maximum(x_ref[0] * s3_ref[...] + b3_ref[...], 0.0)
    sc = jnp.dot(a3.reshape(H * W, C), wsc_ref[...],
                 preferred_element_type=jnp.float32)

    def tap(dh, dw, kh, kw):
        patch = apad[dh:dh + H, dw:dw + W, :].reshape(H * W, C)
        return jnp.dot(patch, wt_ref[kh * 3 + kw],
                       preferred_element_type=jnp.float32)

    # stride 2, pad 1, out_pad 1:  oh = 2*ih - 1 + kh ; ow = 2*iw - 1 + kw
    o_ref[0, 0] = (tap(0, 0, 1, 1) + sc).reshape(H, W, Co)           # (even, even)
    o_ref[0, 1] = (tap(0, 1, 1, 0) + tap(0, 0, 1, 2)).reshape(H, W, Co)  # (even, odd)
    o_ref[0, 2] = (tap(1, 0, 0, 1) + tap(0, 0, 2, 1)).reshape(H, W, Co)  # (odd, even)
    o_ref[0, 3] = (tap(1, 1, 0, 0) + tap(1, 0, 0, 2)
                   + tap(0, 1, 2, 0) + tap(0, 0, 2, 2)).reshape(H, W, Co)  # (odd, odd)


def bn_relu_upsample_tail(h, x, s2, b2, s3, b3, wt9, wsc):
    """h, x: (N,H,W,C); wt9: (9,C,Co); wsc: (C,Co).  Returns (N,4,H,W,Co)."""
    N, H, W, C = h.shape
    Co = wsc.shape[1]
    return pl.pallas_call(
        _up_tail_kernel,
        out_shape=jax.ShapeDtypeStruct((N, 4, H, W, Co), jnp.float32),
        grid=(N,),
        in_specs=[
            pl.BlockSpec((1, H, W, C), lambda n: (n, 0, 0, 0)),
            pl.BlockSpec((1, H, W, C), lambda n: (n, 0, 0, 0)),
            pl.BlockSpec((1, 1, C), lambda n: (0, 0, 0)),
            pl.BlockSpec((1, 1, C), lambda n: (0, 0, 0)),
            pl.BlockSpec((1, 1, C), lambda n: (0, 0, 0)),
            pl.BlockSpec((1, 1, C), lambda n: (0, 0, 0)),
            pl.BlockSpec((9, C, Co), lambda n: (0, 0, 0)),
            pl.BlockSpec((C, Co), lambda n: (0, 0)),
        ],
        out_specs=pl.BlockSpec((1, 4, H, W, Co), lambda n: (n, 0, 0, 0, 0)),
        scratch_shapes=[pltpu.VMEM((H + 1, W + 1, C), jnp.float32)],
        compiler_params=pltpu.CompilerParams(
            dimension_semantics=("parallel",),
            vmem_limit_bytes=32 * 1024 * 1024),
    )(h, x, s2, b2, s3, b3, wt9, wsc)


# --------------------------------------------------------------------------
# BN scale/shift from (fused) batch statistics; weight preprocessing.
# --------------------------------------------------------------------------
def _bn_from_stats(tsum, tsq, count, gamma, beta, cp):
    g = jnp.pad(gamma.astype(jnp.float32), (0, cp - gamma.shape[0]))
    b = jnp.pad(beta.astype(jnp.float32), (0, cp - beta.shape[0]))
    mean = tsum / count
    var = jnp.maximum(tsq / count - mean * mean, 0.0)   # biased, as PyTorch BN
    scale = g * lax.rsqrt(var + EPS)
    shift = b - mean * scale
    return scale.reshape(1, 1, cp), shift.reshape(1, 1, cp)


def _prep_conv_w(w_oihw, cin_p, cout_p):
    # Conv2d weight (Co, Ci, 3, 3) -> (9, Ci_pad, Co_pad), tap index kh*3+kw.
    k = jnp.transpose(w_oihw.astype(jnp.float32), (2, 3, 1, 0))   # (3,3,Ci,Co)
    ci, co = k.shape[2], k.shape[3]
    k = k.reshape(9, ci, co)
    return jnp.pad(k, ((0, 0), (0, cin_p - ci), (0, cout_p - co)))


def _prep_convT_w(w_iohw, cin_p, cout_p):
    # ConvTranspose2d weight (Ci, Co, 3, 3) -> (9, Ci_pad, Co_pad).
    k = jnp.transpose(w_iohw.astype(jnp.float32), (2, 3, 0, 1))   # (3,3,Ci,Co)
    ci, co = k.shape[2], k.shape[3]
    k = k.reshape(9, ci, co)
    return jnp.pad(k, ((0, 0), (0, cin_p - ci), (0, cout_p - co)))


# --------------------------------------------------------------------------
# DecoderResidualBlock forward (Pallas path).  x: NCHW -> NCHW.
# --------------------------------------------------------------------------
def decoder_residual_block_pallas(x_nchw, params):
    xf = jnp.transpose(x_nchw, (0, 2, 3, 1)).astype(jnp.float32)   # -> NHWC
    N, H, W, C = xf.shape
    Cp = _round_up(C, LANE)
    x = _pad_last(xf, Cp)                                          # lane-dense
    count = float(N * H * W)
    # Stats of the block input (only full-tensor reduction done in plain JAX).
    x_sum = jnp.sum(x, axis=(0, 1, 2))
    x_sq = jnp.sum(x * x, axis=(0, 1, 2))

    for p in params:
        s1, sh1 = _bn_from_stats(x_sum, x_sq, count, p['g1'], p['b1'], Cp)
        h, hst = bn_relu_conv3x3(x, s1, sh1, _prep_conv_w(p['w1'], Cp, Cp))
        h_sum = jnp.sum(hst[:, 0, :], axis=0)
        h_sq = jnp.sum(hst[:, 1, :], axis=0)
        s2, sh2 = _bn_from_stats(h_sum, h_sq, count, p['g2'], p['b2'], Cp)

        if p['upsample']:
            Co = p['w3'].shape[1]
            Cop = _round_up(Co, LANE)
            s3, sh3 = _bn_from_stats(x_sum, x_sq, count, p['g3'], p['b3'], Cp)
            wt = _prep_convT_w(p['w2'], Cp, Cop)
            wsc = jnp.pad(p['w3'][:, :, 0, 0].astype(jnp.float32),
                          ((0, Cp - p['w3'].shape[0]), (0, Cop - Co)))
            sub = bn_relu_upsample_tail(h, x, s2, sh2, s3, sh3, wt, wsc)
            # (N, 4, H, W, Cop) -> (N, r, c, H, W, Co) -> NCHW (N, Co, 2H, 2W).
            # Sub-pixel interleave folds into the single NHWC->NCHW transpose.
            sub = sub.reshape(N, 2, 2, H, W, Cop)[..., :Co]
            return sub.transpose(0, 5, 3, 1, 4, 2).reshape(N, Co, 2 * H, 2 * W)

        w2 = _prep_conv_w(p['w2'], Cp, Cp)
        x, xst = bn_relu_conv3x3(h, s2, sh2, w2, residual=x)   # fused residual
        x_sum = jnp.sum(xst[:, 0, :], axis=0)
        x_sq = jnp.sum(xst[:, 1, :], axis=0)

    # Only reached if no layer upsamples (not the case for this module).
    return jnp.transpose(x[..., :C], (0, 3, 1, 2))


# --------------------------------------------------------------------------
# Pure-JAX reference (NCHW, mirrors the PyTorch module) for verification
# --------------------------------------------------------------------------
def _ref_bn_relu(x, gamma, beta):
    mean = jnp.mean(x, axis=(0, 2, 3), keepdims=True)
    var = jnp.var(x, axis=(0, 2, 3), keepdims=True)
    xn = (x - mean) / jnp.sqrt(var + EPS)
    return jnp.maximum(xn * gamma.reshape(1, -1, 1, 1) + beta.reshape(1, -1, 1, 1), 0.0)


def _ref_conv3x3(x, w):
    return lax.conv_general_dilated(x, w, (1, 1), ((1, 1), (1, 1)),
                                    dimension_numbers=('NCHW', 'OIHW', 'NCHW'),
                                    precision=lax.Precision.HIGHEST)


def _ref_convT(x, w, stride, pad, opad):
    k = w.shape[2]
    wf = jnp.flip(w, axis=(2, 3)).transpose(1, 0, 2, 3)           # (Co,Ci,kh,kw)
    pb, pa = k - 1 - pad, k - 1 - pad + opad
    return lax.conv_general_dilated(x, wf, (1, 1), ((pb, pa), (pb, pa)),
                                    lhs_dilation=(stride, stride),
                                    dimension_numbers=('NCHW', 'OIHW', 'NCHW'),
                                    precision=lax.Precision.HIGHEST)


def decoder_residual_block_ref(x, params):
    for p in params:
        identity = x
        h = _ref_conv3x3(_ref_bn_relu(x, p['g1'], p['b1']), p['w1'])
        a2 = _ref_bn_relu(h, p['g2'], p['b2'])
        if p['upsample']:
            y = _ref_convT(a2, p['w2'], 2, 1, 1)
            identity = _ref_convT(_ref_bn_relu(identity, p['g3'], p['b3']), p['w3'], 2, 0, 1)
        else:
            y = _ref_conv3x3(a2, p['w2'])
        x = y + identity
    return x


# --------------------------------------------------------------------------
# Deterministic parameter init (shapes follow the PyTorch __init__)
# --------------------------------------------------------------------------
def init_params(key, hidden, output, layers):
    params = []
    for i in range(layers):
        upsample = (i == layers - 1)
        co = output if upsample else hidden
        key, k0, k1, k2, k3, k4, k5, k6, k7, k8 = jax.random.split(key, 10)
        p = dict(
            g1=1.0 + 0.1 * jax.random.normal(k0, (hidden,), jnp.float32),
            b1=0.1 * jax.random.normal(k1, (hidden,), jnp.float32),
            w1=0.1 * jax.random.normal(k2, (hidden, hidden, 3, 3), jnp.float32),   # Conv2d OIHW
            g2=1.0 + 0.1 * jax.random.normal(k3, (hidden,), jnp.float32),
            b2=0.1 * jax.random.normal(k4, (hidden,), jnp.float32),
            upsample=upsample,
        )
        if upsample:
            p['w2'] = 0.1 * jax.random.normal(k5, (hidden, co, 3, 3), jnp.float32)  # ConvT (in,out,kh,kw)
            p['g3'] = 1.0 + 0.1 * jax.random.normal(k6, (hidden,), jnp.float32)
            p['b3'] = 0.1 * jax.random.normal(k7, (hidden,), jnp.float32)
            p['w3'] = 0.1 * jax.random.normal(k8, (hidden, co, 1, 1), jnp.float32)  # ConvT 1x1
        else:
            p['w2'] = 0.1 * jax.random.normal(k5, (co, hidden, 3, 3), jnp.float32)  # Conv2d OIHW
        params.append(p)
    return params


if __name__ == "__main__":
    key = jax.random.PRNGKey(0)
    kx, kp = jax.random.split(key)

    N, C_hidden, C_out, H, W, layers = 2, 8, 4, 8, 8, 2
    x = jax.random.normal(kx, (N, C_hidden, H, W), jnp.float32)     # NCHW, like PyTorch
    params = init_params(kp, C_hidden, C_out, layers)

    out = decoder_residual_block_pallas(x, params)
    out = jax.block_until_ready(out)
    assert out.shape == (N, C_out, 2 * H, 2 * W), out.shape

    ref = decoder_residual_block_ref(x, params)
    np.testing.assert_allclose(np.asarray(out), np.asarray(ref), rtol=2e-2, atol=2e-2)

    print("KERNEL_OK")
</pallas_src>

<mosaic_0001>
module attributes {stable_mosaic.version = 11 : i64} {
  func.func @_conv3x3_kernel(%arg0: i32, %arg1: memref<1x8x8x128xf32, #tpu.memory_space<vmem>>, %arg2: memref<1x1x128xf32, #tpu.memory_space<vmem>>, %arg3: memref<1x1x128xf32, #tpu.memory_space<vmem>>, %arg4: memref<9x128x128xf32, #tpu.memory_space<vmem>>, %arg5: memref<1x8x8x128xf32, #tpu.memory_space<vmem>>, %arg6: memref<1x2x128xf32, #tpu.memory_space<vmem>>, %arg7: memref<10x10x128xf32, #tpu.memory_space<vmem>>) attributes {dimension_semantics = [#tpu.dimension_semantics<parallel>], iteration_bounds = array<i64: 2>, scalar_prefetch = 0 : i64, scratch_operands = 1 : i64, tpu.core_type = #tpu.core_type<tc>, window_params = [{transform_indices = @transform_0, window_bounds = array<i64: 1, 8, 8, 128>}, {pipeline_mode = #tpu.pipeline_mode<synchronous>, transform_indices = @transform_1, window_bounds = array<i64: 1, 1, 128>}, {pipeline_mode = #tpu.pipeline_mode<synchronous>, transform_indices = @transform_2, window_bounds = array<i64: 1, 1, 128>}, {pipeline_mode = #tpu.pipeline_mode<synchronous>, transform_indices = @transform_3, window_bounds = array<i64: 9, 128, 128>}, {transform_indices = @transform_4, window_bounds = array<i64: 1, 8, 8, 128>}, {transform_indices = @transform_5, window_bounds = array<i64: 1, 2, 128>}]} {
    %c0 = arith.constant 0 : index
    %c0_0 = arith.constant 0 : index
    %c0_1 = arith.constant 0 : index
    %c0_2 = arith.constant 0 : index
    %0 = vector.load %arg1[%c0, %c0_0, %c0_1, %c0_2] : memref<1x8x8x128xf32, #tpu.memory_space<vmem>>, vector<1x8x8x128xf32>
    %1 = vector.shape_cast %0 : vector<1x8x8x128xf32> to vector<8x8x128xf32>
    %c0_3 = arith.constant 0 : index
    %c0_4 = arith.constant 0 : index
    %c0_5 = arith.constant 0 : index
    %2 = vector.load %arg2[%c0_3, %c0_4, %c0_5] : memref<1x1x128xf32, #tpu.memory_space<vmem>>, vector<1x1x128xf32>
    %3 = vector.broadcast %2 : vector<1x1x128xf32> to vector<8x8x128xf32>
    %4 = arith.mulf %1, %3 : vector<8x8x128xf32>
    %c0_6 = arith.constant 0 : index
    %c0_7 = arith.constant 0 : index
    %c0_8 = arith.constant 0 : index
    %5 = vector.load %arg3[%c0_6, %c0_7, %c0_8] : memref<1x1x128xf32, #tpu.memory_space<vmem>>, vector<1x1x128xf32>
    %6 = vector.broadcast %5 : vector<1x1x128xf32> to vector<8x8x128xf32>
    %7 = arith.addf %4, %6 : vector<8x8x128xf32>
    %cst = arith.constant 0.000000e+00 : f32
    %8 = vector.broadcast %cst : f32 to vector<8x8x128xf32>
    %9 = arith.maximumf %7, %8 : vector<8x8x128xf32>
    %cst_9 = arith.constant 0.000000e+00 : f32
    %10 = vector.broadcast %cst_9 : f32 to vector<1x10x128xf32>
    %c0_10 = arith.constant 0 : index
    %c0_11 = arith.constant 0 : index
    %c0_12 = arith.constant 0 : index
    %11 = vector.load %arg7[%c0_10, %c0_11, %c0_12] : memref<10x10x128xf32, #tpu.memory_space<vmem>>, vector<1x10x128xf32>
    tpu.vector_store %arg7[%c0_10, %c0_11, %c0_12], %10 {strides = array<i32>} : memref<10x10x128xf32, #tpu.memory_space<vmem>>, vector<1x10x128xf32>,
    %cst_13 = arith.constant 0.000000e+00 : f32
    %12 = vector.broadcast %cst_13 : f32 to vector<1x10x128xf32>
    %c9 = arith.constant 9 : index
    %c0_14 = arith.constant 0 : index
    %c0_15 = arith.constant 0 : index
    %13 = vector.load %arg7[%c9, %c0_14, %c0_15] : memref<10x10x128xf32, #tpu.memory_space<vmem>>, vector<1x10x128xf32>
    tpu.vector_store %arg7[%c9, %c0_14, %c0_15], %12 {strides = array<i32>} : memref<10x10x128xf32, #tpu.memory_space<vmem>>, vector<1x10x128xf32>,
    %cst_16 = arith.constant 0.000000e+00 : f32
    %14 = vector.broadcast %cst_16 : f32 to vector<8x1x128xf32>
    %c1 = arith.constant 1 : index
    %c0_17 = arith.constant 0 : index
    %c0_18 = arith.constant 0 : index
    %15 = vector.load %arg7[%c1, %c0_17, %c0_18] : memref<10x10x128xf32, #tpu.memory_space<vmem>>, vector<8x1x128xf32>
    tpu.vector_store %arg7[%c1, %c0_17, %c0_18], %14 {strides = array<i32>} : memref<10x10x128xf32, #tpu.memory_space<vmem>>, vector<8x1x128xf32>,
    %cst_19 = arith.constant 0.000000e+00 : f32
    %16 = vector.broadcast %cst_19 : f32 to vector<8x1x128xf32>
    %c1_20 = arith.constant 1 : index
    %c9_21 = arith.constant 9 : index
    %c0_22 = arith.constant 0 : index
    %17 = vector.load %arg7[%c1_20, %c9_21, %c0_22] : memref<10x10x128xf32, #tpu.memory_space<vmem>>, vector<8x1x128xf32>
    tpu.vector_store %arg7[%c1_20, %c9_21, %c0_22], %16 {strides = array<i32>} : memref<10x10x128xf32, #tpu.memory_space<vmem>>, vector<8x1x128xf32>,
    %c1_23 = arith.constant 1 : index
    %c1_24 = arith.constant 1 : index
    %c0_25 = arith.constant 0 : index
    %18 = vector.load %arg7[%c1_23, %c1_24, %c0_25] : memref<10x10x128xf32, #tpu.memory_space<vmem>>, vector<8x8x128xf32>
    tpu.vector_store %arg7[%c1_23, %c1_24, %c0_25], %9 {strides = array<i32>} : memref<10x10x128xf32, #tpu.memory_space<vmem>>, vector<8x8x128xf32>,
    %cst_26 = arith.constant 0.000000e+00 : f32
    %19 = vector.broadcast %cst_26 : f32 to vector<64x128xf32>
    %c0_27 = arith.constant 0 : index
    %c0_28 = arith.constant 0 : index
    %c0_29 = arith.constant 0 : index
    %20 = vector.load %arg7[%c0_27, %c0_28, %c0_29] : memref<10x10x128xf32, #tpu.memory_space<vmem>>, vector<8x8x128xf32>
    %21 = vector.shape_cast %20 : vector<8x8x128xf32> to vector<64x128xf32>
    %c0_30 = arith.constant 0 : index
    %c0_31 = arith.constant 0 : index
    %c0_32 = arith.constant 0 : index
    %22 = vector.load %arg4[%c0_30, %c0_31, %c0_32] : memref<9x128x128xf32, #tpu.memory_space<vmem>>, vector<1x128x128xf32>
    %23 = vector.shape_cast %22 : vector<1x128x128xf32> to vector<128x128xf32>
    %cst_33 = arith.constant dense<0.000000e+00> : vector<64x128xf32>
    %24 = tpu.matmul %21, %23, %cst_33 {dimension_numbers = #tpu.dot_dimension_numbers<[1], [0], [0], [1], [0, 0, 1, 1], [], []>} : vector<64x128xf32>, vector<128x128xf32>, vector<64x128xf32> -> vector<64x128xf32>
    %25 = arith.addf %19, %24 : vector<64x128xf32>
    %c0_34 = arith.constant 0 : index
    %c1_35 = arith.constant 1 : index
    %c0_36 = arith.constant 0 : index
    %26 = vector.load %arg7[%c0_34, %c1_35, %c0_36] : memref<10x10x128xf32, #tpu.memory_space<vmem>>, vector<8x8x128xf32>
    %27 = vector.shape_cast %26 : vector<8x8x128xf32> to vector<64x128xf32>
    %c1_37 = arith.constant 1 : index
    %c0_38 = arith.constant 0 : index
    %c0_39 = arith.constant 0 : index
    %28 = vector.load %arg4[%c1_37, %c0_38, %c0_39] : memref<9x128x128xf32, #tpu.memory_space<vmem>>, vector<1x128x128xf32>
    %29 = vector.shape_cast %28 : vector<1x128x128xf32> to vector<128x128xf32>
    %cst_40 = arith.constant dense<0.000000e+00> : vector<64x128xf32>
    %30 = tpu.matmul %27, %29, %cst_40 {dimension_numbers = #tpu.dot_dimension_numbers<[1], [0], [0], [1], [0, 0, 1, 1], [], []>} : vector<64x128xf32>, vector<128x128xf32>, vector<64x128xf32> -> vector<64x128xf32>
    %31 = arith.addf %25, %30 : vector<64x128xf32>
    %c0_41 = arith.constant 0 : index
    %c2 = arith.constant 2 : index
    %c0_42 = arith.constant 0 : index
    %32 = vector.load %arg7[%c0_41, %c2, %c0_42] : memref<10x10x128xf32, #tpu.memory_space<vmem>>, vector<8x8x128xf32>
    %33 = vector.shape_cast %32 : vector<8x8x128xf32> to vector<64x128xf32>
    %c2_43 = arith.constant 2 : index
    %c0_44 = arith.constant 0 : index
    %c0_45 = arith.constant 0 : index
    %34 = vector.load %arg4[%c2_43, %c0_44, %c0_45] : memref<9x128x128xf32, #tpu.memory_space<vmem>>, vector<1x128x128xf32>
    %35 = vector.shape_cast %34 : vector<1x128x128xf32> to vector<128x128xf32>
    %cst_46 = arith.constant dense<0.000000e+00> : vector<64x128xf32>
    %36 = tpu.matmul %33, %35, %cst_46 {dimension_numbers = #tpu.dot_dimension_numbers<[1], [0], [0], [1], [0, 0, 1, 1], [], []>} : vector<64x128xf32>, vector<128x128xf32>, vector<64x128xf32> -> vector<64x128xf32>
    %37 = arith.addf %31, %36 : vector<64x128xf32>
    %c1_47 = arith.constant 1 : index
    %c0_48 = arith.constant 0 : index
    %c0_49 = arith.constant 0 : index
    %38 = vector.load %arg7[%c1_47, %c0_48, %c0_49] : memref<10x10x128xf32, #tpu.memory_space<vmem>>, vector<8x8x128xf32>
    %39 = vector.shape_cast %38 : vector<8x8x128xf32> to vector<64x128xf32>
    %c3 = arith.constant 3 : index
    %c0_50 = arith.constant 0 : index
    %c0_51 = arith.constant 0 : index
    %40 = vector.load %arg4[%c3, %c0_50, %c0_51] : memref<9x128x128xf32, #tpu.memory_space<vmem>>, vector<1x128x128xf32>
    %41 = vector.shape_cast %40 : vector<1x128x128xf32> to vector<128x128xf32>
    %cst_52 = arith.constant dense<0.000000e+00> : vector<64x128xf32>
    %42 = tpu.matmul %39, %41, %cst_52 {dimension_numbers = #tpu.dot_dimension_numbers<[1], [0], [0], [1], [0, 0, 1, 1], [], []>} : vector<64x128xf32>, vector<128x128xf32>, vector<64x128xf32> -> vector<64x128xf32>
    %43 = arith.addf %37, %42 : vector<64x128xf32>
    %c1_53 = arith.constant 1 : index
    %c1_54 = arith.constant 1 : index
    %c0_55 = arith.constant 0 : index
    %44 = vector.load %arg7[%c1_53, %c1_54, %c0_55] : memref<10x10x128xf32, #tpu.memory_space<vmem>>, vector<8x8x128xf32>
    %45 = vector.shape_cast %44 : vector<8x8x128xf32> to vector<64x128xf32>
    %c4 = arith.constant 4 : index
    %c0_56 = arith.constant 0 : index
    %c0_57 = arith.constant 0 : index
    %46 = vector.load %arg4[%c4, %c0_56, %c0_57] : memref<9x128x128xf32, #tpu.memory_space<vmem>>, vector<1x128x128xf32>
    %47 = vector.shape_cast %46 : vector<1x128x128xf32> to vector<128x128xf32>
    %cst_58 = arith.constant dense<0.000000e+00> : vector<64x128xf32>
    %48 = tpu.matmul %45, %47, %cst_58 {dimension_numbers = #tpu.dot_dimension_numbers<[1], [0], [0], [1], [0, 0, 1, 1], [], []>} : vector<64x128xf32>, vector<128x128xf32>, vector<64x128xf32> -> vector<64x128xf32>
    %49 = arith.addf %43, %48 : vector<64x128xf32>
    %c1_59 = arith.constant 1 : index
    %c2_60 = arith.constant 2 : index
    %c0_61 = arith.constant 0 : index
    %50 = vector.load %arg7[%c1_59, %c2_60, %c0_61] : memref<10x10x128xf32, #tpu.memory_space<vmem>>, vector<8x8x128xf32>
    %51 = vector.shape_cast %50 : vector<8x8x128xf32> to vector<64x128xf32>
    %c5 = arith.constant 5 : index
    %c0_62 = arith.constant 0 : index
    %c0_63 = arith.constant 0 : index
    %52 = vector.load %arg4[%c5, %c0_62, %c0_63] : memref<9x128x128xf32, #tpu.memory_space<vmem>>, vector<1x128x128xf32>
    %53 = vector.shape_cast %52 : vector<1x128x128xf32> to vector<128x128xf32>
    %cst_64 = arith.constant dense<0.000000e+00> : vector<64x128xf32>
    %54 = tpu.matmul %51, %53, %cst_64 {dimension_numbers = #tpu.dot_dimension_numbers<[1], [0], [0], [1], [0, 0, 1, 1], [], []>} : vector<64x128xf32>, vector<128x128xf32>, vector<64x128xf32> -> vector<64x128xf32>
    %55 = arith.addf %49, %54 : vector<64x128xf32>
    %c2_65 = arith.constant 2 : index
    %c0_66 = arith.constant 0 : index
    %c0_67 = arith.constant 0 : index
    %56 = vector.load %arg7[%c2_65, %c0_66, %c0_67] : memref<10x10x128xf32, #tpu.memory_space<vmem>>, vector<8x8x128xf32>
    %57 = vector.shape_cast %56 : vector<8x8x128xf32> to vector<64x128xf32>
    %c6 = arith.constant 6 : index
    %c0_68 = arith.constant 0 : index
    %c0_69 = arith.constant 0 : index
    %58 = vector.load %arg4[%c6, %c0_68, %c0_69] : memref<9x128x128xf32, #tpu.memory_space<vmem>>, vector<1x128x128xf32>
    %59 = vector.shape_cast %58 : vector<1x128x128xf32> to vector<128x128xf32>
    %cst_70 = arith.constant dense<0.000000e+00> : vector<64x128xf32>
    %60 = tpu.matmul %57, %59, %cst_70 {dimension_numbers = #tpu.dot_dimension_numbers<[1], [0], [0], [1], [0, 0, 1, 1], [], []>} : vector<64x128xf32>, vector<128x128xf32>, vector<64x128xf32> -> vector<64x128xf32>
    %61 = arith.addf %55, %60 : vector<64x128xf32>
    %c2_71 = arith.constant 2 : index
    %c1_72 = arith.constant 1 : index
    %c0_73 = arith.constant 0 : index
    %62 = vector.load %arg7[%c2_71, %c1_72, %c0_73] : memref<10x10x128xf32, #tpu.memory_space<vmem>>, vector<8x8x128xf32>
    %63 = vector.shape_cast %62 : vector<8x8x128xf32> to vector<64x128xf32>
    %c7 = arith.constant 7 : index
    %c0_74 = arith.constant 0 : index
    %c0_75 = arith.constant 0 : index
    %64 = vector.load %arg4[%c7, %c0_74, %c0_75] : memref<9x128x128xf32, #tpu.memory_space<vmem>>, vector<1x128x128xf32>
    %65 = vector.shape_cast %64 : vector<1x128x128xf32> to vector<128x128xf32>
    %cst_76 = arith.constant dense<0.000000e+00> : vector<64x128xf32>
    %66 = tpu.matmul %63, %65, %cst_76 {dimension_numbers = #tpu.dot_dimension_numbers<[1], [0], [0], [1], [0, 0, 1, 1], [], []>} : vector<64x128xf32>, vector<128x128xf32>, vector<64x128xf32> -> vector<64x128xf32>
    %67 = arith.addf %61, %66 : vector<64x128xf32>
    %c2_77 = arith.constant 2 : index
    %c2_78 = arith.constant 2 : index
    %c0_79 = arith.constant 0 : index
    %68 = vector.load %arg7[%c2_77, %c2_78, %c0_79] : memref<10x10x128xf32, #tpu.memory_space<vmem>>, vector<8x8x128xf32>
    %69 = vector.shape_cast %68 : vector<8x8x128xf32> to vector<64x128xf32>
    %c8 = arith.constant 8 : index
    %c0_80 = arith.constant 0 : index
    %c0_81 = arith.constant 0 : index
    %70 = vector.load %arg4[%c8, %c0_80, %c0_81] : memref<9x128x128xf32, #tpu.memory_space<vmem>>, vector<1x128x128xf32>
    %71 = vector.shape_cast %70 : vector<1x128x128xf32> to vector<128x128xf32>
    %cst_82 = arith.constant dense<0.000000e+00> : vector<64x128xf32>
    %72 = tpu.matmul %69, %71, %cst_82 {dimension_numbers = #tpu.dot_dimension_numbers<[1], [0], [0], [1], [0, 0, 1, 1], [], []>} : vector<64x128xf32>, vector<128x128xf32>, vector<64x128xf32> -> vector<64x128xf32>
    %73 = arith.addf %67, %72 : vector<64x128xf32>
    %74 = vector.shape_cast %73 : vector<64x128xf32> to vector<8x8x128xf32>
    %c0_83 = arith.constant 0 : index
    %c0_84 = arith.constant 0 : index
    %c0_85 = arith.constant 0 : index
    %c0_86 = arith.constant 0 : index
    %75 = vector.load %arg5[%c0_83, %c0_84, %c0_85, %c0_86] : memref<1x8x8x128xf32, #tpu.memory_space<vmem>>, vector<1x8x8x128xf32>
    %76 = vector.shape_cast %75 : vector<1x8x8x128xf32> to vector<8x8x128xf32>
    %77 = vector.shape_cast %74 : vector<8x8x128xf32> to vector<1x8x8x128xf32>
    tpu.vector_store %arg5[%c0_83, %c0_84, %c0_85, %c0_86], %77 {strides = array<i32>} : memref<1x8x8x128xf32, #tpu.memory_space<vmem>>, vector<1x8x8x128xf32>,
    %cst_87 = arith.constant dense<0.000000e+00> : vector<128xf32>
    %78 = vector.multi_reduction <add>, %73, %cst_87 [0] : vector<64x128xf32> to vector<128xf32>
    %79 = vector.shape_cast %78 : vector<128xf32> to vector<1x128xf32>
    %c0_88 = arith.constant 0 : index
    %c0_89 = arith.constant 0 : index
    %c0_90 = arith.constant 0 : index
    %80 = vector.load %arg6[%c0_88, %c0_89, %c0_90] : memref<1x2x128xf32, #tpu.memory_space<vmem>>, vector<1x1x128xf32>
    %81 = vector.shape_cast %80 : vector<1x1x128xf32> to vector<1x128xf32>
    %82 = vector.shape_cast %79 : vector<1x128xf32> to vector<1x1x128xf32>
    tpu.vector_store %arg6[%c0_88, %c0_89, %c0_90], %82 {strides = array<i32>} : memref<1x2x128xf32, #tpu.memory_space<vmem>>, vector<1x1x128xf32>,
    %83 = arith.mulf %73, %73 : vector<64x128xf32>
    %cst_91 = arith.constant dense<0.000000e+00> : vector<128xf32>
    %84 = vector.multi_reduction <add>, %83, %cst_91 [0] : vector<64x128xf32> to vector<128xf32>
    %85 = vector.shape_cast %84 : vector<128xf32> to vector<1x128xf32>
    %c0_92 = arith.constant 0 : index
    %c1_93 = arith.constant 1 : index
    %c0_94 = arith.constant 0 : index
    %86 = vector.load %arg6[%c0_92, %c1_93, %c0_94] : memref<1x2x128xf32, #tpu.memory_space<vmem>>, vector<1x1x128xf32>
    %87 = vector.shape_cast %86 : vector<1x1x128xf32> to vector<1x128xf32>
    %88 = vector.shape_cast %85 : vector<1x128xf32> to vector<1x1x128xf32>
    tpu.vector_store %arg6[%c0_92, %c1_93, %c0_94], %88 {strides = array<i32>} : memref<1x2x128xf32, #tpu.memory_space<vmem>>, vector<1x1x128xf32>,
    return
  }
  func.func @transform_0(%arg0: i32) -> (i32, i32, i32, i32) {
    %c0_i32 = arith.constant 0 : i32
    %c0_i32_0 = arith.constant 0 : i32
    %c0_i32_1 = arith.constant 0 : i32
    %c0_i32_2 = arith.constant 0 : i32
    return %arg0, %c0_i32, %c0_i32_0, %c0_i32_1 : i32, i32, i32, i32
  }
  func.func @transform_1(%arg0: i32) -> (i32, i32, i32) {
    %c0_i32 = arith.constant 0 : i32
    %c0_i32_0 = arith.constant 0 : i32
    %c0_i32_1 = arith.constant 0 : i32
    %c0_i32_2 = arith.constant 0 : i32
    return %c0_i32, %c0_i32_0, %c0_i32_1 : i32, i32, i32
  }
  func.func @transform_2(%arg0: i32) -> (i32, i32, i32) {
    %c0_i32 = arith.constant 0 : i32
    %c0_i32_0 = arith.constant 0 : i32
    %c0_i32_1 = arith.constant 0 : i32
    %c0_i32_2 = arith.constant 0 : i32
    return %c0_i32, %c0_i32_0, %c0_i32_1 : i32, i32, i32
  }
  func.func @transform_3(%arg0: i32) -> (i32, i32, i32) {
    %c0_i32 = arith.constant 0 : i32
    %c0_i32_0 = arith.constant 0 : i32
    %c0_i32_1 = arith.constant 0 : i32
    %c0_i32_2 = arith.constant 0 : i32
    return %c0_i32, %c0_i32_0, %c0_i32_1 : i32, i32, i32
  }
  func.func @transform_4(%arg0: i32) -> (i32, i32, i32, i32) {
    %c0_i32 = arith.constant 0 : i32
    %c0_i32_0 = arith.constant 0 : i32
    %c0_i32_1 = arith.constant 0 : i32
    %c0_i32_2 = arith.constant 0 : i32
    return %arg0, %c0_i32, %c0_i32_0, %c0_i32_1 : i32, i32, i32, i32
  }
  func.func @transform_5(%arg0: i32) -> (i32, i32, i32) {
    %c0_i32 = arith.constant 0 : i32
    %c0_i32_0 = arith.constant 0 : i32
    %c0_i32_1 = arith.constant 0 : i32
    return %arg0, %c0_i32, %c0_i32_0 : i32, i32, i32
  }
}

</mosaic_0001>

<llo_original>
// kernel: tpu_custom_call.1
$region0: #{tpu_custom_call.1}
  #allocation0 [shape = 'u32[]', space=smem, size = 0x4, offset = 0x4, fixed_abs, tag = 'smem constant byte address 0x4 - core index']
  #allocation1 [shape = 'u32[72,128]{1,0:T(1,128)}', space=vmem, size = 0x9000, scoped, tag = 'internal scratch']
  #allocation2 [shape = 'f32[10,10,128]{2,1,0:T(8,128)}', space=vmem, size = 0x14000, scoped, tag = 'scratch operand']
  %s0 = inlined_call_operand.hbm [shape: f32[2,8,8,128], index: 0, kind: input, shape index: {}]
  %s1 = inlined_call_operand.hbm [shape: f32[1,1,128], index: 1, kind: input, shape index: {}]
  %s2 = inlined_call_operand.vmem [shape: f32[1,1,128], index: 2, kind: input, shape index: {}]
  %s3 = inlined_call_operand.hbm [shape: f32[9,128,128], index: 3, kind: input, shape index: {}]
  %s4 = inlined_call_operand.hbm [shape: f32[2,8,8,128], index: 4, kind: output, shape index: {0}]
  %s5 = inlined_call_operand.hbm [shape: f32[2,2,128], index: 5, kind: output, shape index: {1}]
  %6 = xla_tuple %s4, %s5
  %s7 = sld [smem:[#allocation0]]
  $region69: #{tpu_custom_call.1} parent=0
    _
  %s9 = ssub.s32 1, %s7
  %s10 = scalar_select 0, %s9, %s7
  $region1: #{tpu_custom_call.1} parent=0
    #allocation3 [shape = 'u8[65536]{0}', space=vmem, size = 0x10000, scoped, tag = 'input window, operand 0']
    #allocation4 [shape = 's32[2]{0}', space=sflag, size = 0x8, scoped, tag = 'scoped memory for tpu_custom_call.1']
    #allocation5 [shape = 's32[2]{0}', space=sflag, size = 0x8, scoped, tag = 'scoped memory for tpu_custom_call.1']
    #allocation6 [shape = 'u8[512]{0}', space=vmem, size = 0x400, scoped, tag = 'input window, operand 1, single buffered']
    #allocation7 [shape = 's32[1]{0}', space=sflag, size = 0x4, scoped, tag = 'scoped memory for tpu_custom_call.1']
    #allocation8 [shape = 'u8[589824]{0}', space=vmem, size = 0x90000, scoped, tag = 'input window, operand 3, single buffered']
    #allocation9 [shape = 'u8[65536]{0}', space=vmem, size = 0x10000, scoped, tag = 'output window, operand 0']
    #allocation10 [shape = 'u8[2048]{0}', space=vmem, size = 0x800, scoped, tag = 'output window, operand 1']
    #allocation11 [shape = 's32[2]{0}', space=sflag, size = 0x8, scoped, tag = 'scoped memory for tpu_custom_call.1']
    %11 = vsyncpa [#allocation4], 0
    %s12 = scalar_lea.sflag [#allocation4], 1
    %13 = vsyncpa %s12, 0
    %14 = vsyncpa [#allocation7], 0
    %15 = vsyncpa [#allocation5], 0
    %s16 = scalar_lea.sflag [#allocation5], 1
    %17 = vsyncpa %s16, 0
    %18 = vsyncpa [#allocation11], 0
    %s19 = scalar_lea.sflag [#allocation11], 1
    %20 = vsyncpa %s19, 0
    loop: start=0, step=1, limit=4
    $region2: #{tpu_custom_call.1} parent=1 // loop_pre_header
      _
    $region3: #{tpu_custom_call.1} parent=1 // loop_header
      %s22 = sphi 0, %s26
      %p23 = scmp.ge.s32.totalorder %s22, 4
      %s32 = sphi 0, %s34
      %s35 = sphi 0, %s32
      %s36 = sphi 0, %s35
      %s52 = sphi 0, %s36
      %s56 = sphi 0, %s56
      %s58 = sphi 0, %s56
      %s59 = sphi 0, %s58
      %s73 = sphi 0, %s59
      %s77 = sphi 0, %s77
      %s79 = sphi 0, %s77
      %s80 = sphi 0, %s79
      %s94 = sphi 0, %s80
      %s98 = sphi 0, %s98
      %s100 = sphi 0, %s98
      %s101 = sphi 0, %s100
      %s115 = sphi 0, %s101
      %s121 = sphi 0, %s123
      %s124 = sphi 0, %s121
      %s125 = sphi 0, %s124
      %s141 = sphi 0, %s125
      %s147 = sphi 0, %s149
      %s150 = sphi 0, %s147
      %s151 = sphi 0, %s150
      %s167 = sphi 0, %s151
    $region4: #{tpu_custom_call.1} parent=1 // loop_header_branch
      %25 = sbr.rel (%p23) target = $region8
    $region5: #{tpu_custom_call.1} parent=1 // loop_body
      %s27 = ssub.s32 %s22, 1
      %s28 = ssub.s32 %s22, 2
      %s29 = sadd.s32 %s22, 1
      %s30 = ssub.s32 %s22, %s29
      %p31 = scmp.eq.s32.totalorder %s30, 0
      %s33 = sadd.s32 %s32, 1
      %s34 = scalar_select %p31, %s32, %s33
      %p37 = pneg %p31
      %p38 = scmp.eq.s32.totalorder %s22, 1
      %p39 = por %p37, %p38
      %p40 = scmp.ne.s32.totalorder %s32, %s35
      %p41 = scmp.eq.s32.totalorder %s22, 0
      %p42 = por %p40, %p41
      %p43 = scmp.ne.s32.totalorder %s32, %s35
      %p44 = scmp.eq.s32.totalorder %s27, 1
      %p45 = por %p43, %p44
      %p46 = scmp.ne.s32.totalorder %s35, %s36
      %p47 = scmp.eq.s32.totalorder %s27, 0
      %p48 = por %p46, %p47
      %p49 = scmp.ne.s32.totalorder %s35, %s36
      %p50 = scmp.eq.s32.totalorder %s28, 1
      %p51 = por %p49, %p50
      %p53 = scmp.ne.s32.totalorder %s36, %s52
      %p54 = scmp.eq.s32.totalorder %s28, 0
      %p55 = por %p53, %p54
      %s57 = sadd.s32 %s56, 1
      %p60 = scmp.eq.s32.totalorder %s22, 1
      %p61 = scmp.ne.s32.totalorder %s56, %s58
      %p62 = scmp.eq.s32.totalorder %s22, 0
      %p63 = por %p61, %p62
      %p64 = scmp.ne.s32.totalorder %s56, %s58
      %p65 = scmp.eq.s32.totalorder %s27, 1
      %p66 = por %p64, %p65
      %p67 = scmp.ne.s32.totalorder %s58, %s59
      %p68 = scmp.eq.s32.totalorder %s27, 0
      %p69 = por %p67, %p68
      %p70 = scmp.ne.s32.totalorder %s58, %s59
      %p71 = scmp.eq.s32.totalorder %s28, 1
      %p72 = por %p70, %p71
      %p74 = scmp.ne.s32.totalorder %s59, %s73
      %p75 = scmp.eq.s32.totalorder %s28, 0
      %p76 = por %p74, %p75
      %s78 = sadd.s32 %s77, 1
      %p81 = scmp.eq.s32.totalorder %s22, 1
      %p82 = scmp.ne.s32.totalorder %s77, %s79
      %p83 = scmp.eq.s32.totalorder %s22, 0
      %p84 = por %p82, %p83
      %p85 = scmp.ne.s32.totalorder %s77, %s79
      %p86 = scmp.eq.s32.totalorder %s27, 1
      %p87 = por %p85, %p86
      %p88 = scmp.ne.s32.totalorder %s79, %s80
      %p89 = scmp.eq.s32.totalorder %s27, 0
      %p90 = por %p88, %p89
      %p91 = scmp.ne.s32.totalorder %s79, %s80
      %p92 = scmp.eq.s32.totalorder %s28, 1
      %p93 = por %p91, %p92
      %p95 = scmp.ne.s32.totalorder %s80, %s94
      %p96 = scmp.eq.s32.totalorder %s28, 0
      %p97 = por %p95, %p96
      %s99 = sadd.s32 %s98, 1
      %p102 = scmp.eq.s32.totalorder %s22, 1
      %p103 = scmp.ne.s32.totalorder %s98, %s100
      %p104 = scmp.eq.s32.totalorder %s22, 0
      %p105 = por %p103, %p104
      %p106 = scmp.ne.s32.totalorder %s98, %s100
      %p107 = scmp.eq.s32.totalorder %s27, 1
      %p108 = por %p106, %p107
      %p109 = scmp.ne.s32.totalorder %s100, %s101
      %p110 = scmp.eq.s32.totalorder %s27, 0
      %p111 = por %p109, %p110
      %p112 = scmp.ne.s32.totalorder %s100, %s101
      %p113 = scmp.eq.s32.totalorder %s28, 1
      %p114 = por %p112, %p113
      %p116 = scmp.ne.s32.totalorder %s101, %s115
      %p117 = scmp.eq.s32.totalorder %s28, 0
      %p118 = por %p116, %p117
      %s119 = ssub.s32 %s22, %s29
      %p120 = scmp.eq.s32.totalorder %s119, 0
      %s122 = sadd.s32 %s121, 1
      %s123 = scalar_select %p120, %s121, %s122
      %p126 = pneg %p120
      %p127 = scmp.eq.s32.totalorder %s22, 1
      %p128 = por %p126, %p127
      %p129 = scmp.ne.s32.totalorder %s121, %s124
      %p130 = scmp.eq.s32.totalorder %s22, 0
      %p131 = por %p129, %p130
      %p132 = scmp.ne.s32.totalorder %s121, %s124
      %p133 = scmp.eq.s32.totalorder %s27, 1
      %p134 = por %p132, %p133
      %p135 = scmp.ne.s32.totalorder %s124, %s125
      %p136 = scmp.eq.s32.totalorder %s27, 0
      %p137 = por %p135, %p136
      %p138 = scmp.ne.s32.totalorder %s124, %s125
      %p139 = scmp.eq.s32.totalorder %s28, 1
      %p140 = por %p138, %p139
      %p142 = scmp.ne.s32.totalorder %s125, %s141
      %p143 = scmp.eq.s32.totalorder %s28, 0
      %p144 = por %p142, %p143
      %s145 = ssub.s32 %s22, %s29
      %p146 = scmp.eq.s32.totalorder %s145, 0
      %s148 = sadd.s32 %s147, 1
      %s149 = scalar_select %p146, %s147, %s148
      %p152 = pneg %p146
      %p153 = scmp.eq.s32.totalorder %s22, 1
      %p154 = por %p152, %p153
      %p155 = scmp.ne.s32.totalorder %s147, %s150
      %p156 = scmp.eq.s32.totalorder %s22, 0
      %p157 = por %p155, %p156
      %p158 = scmp.ne.s32.totalorder %s147, %s150
      %p159 = scmp.eq.s32.totalorder %s27, 1
      %p160 = por %p158, %p159
      %p161 = scmp.ne.s32.totalorder %s150, %s151
      %p162 = scmp.eq.s32.totalorder %s27, 0
      %p163 = por %p161, %p162
      %p164 = scmp.ne.s32.totalorder %s150, %s151
      %p165 = scmp.eq.s32.totalorder %s28, 1
      %p166 = por %p164, %p165
      %p168 = scmp.ne.s32.totalorder %s151, %s167
      %p169 = scmp.eq.s32.totalorder %s28, 0
      %p170 = por %p168, %p169
      %p171 = scmp.le.s32.totalorder 1, %s22
      %p172 = scmp.lt.s32.totalorder %s22, 3
      %p173 = pnand %p171, %p172
      %p174 = pneg %p173
      // Predicated region
      $region9: #{tpu_custom_call.1} parent=5 // pred_check
        _
      $region10: #{tpu_custom_call.1} parent=5 // pred_check_branch
        %176 = sbr.rel (%p173) target = $region12
      $region11: #{tpu_custom_call.1} parent=5 // pred_region
        %s177 = ssub.s32 %s22, 1
        // Predicated region
        $region13: #{tpu_custom_call.1} parent=11 // pred_check
          %p178 = pneg %p69
        $region14: #{tpu_custom_call.1} parent=11 // pred_check_branch
          %180 = sbr.rel (%p178) target = $region16
        $region15: #{tpu_custom_call.1} parent=11 // pred_region
          %182 = vsyncadd [#allocation7], 0
          %s184 = sshll.u32 %s1, 4
          %s185 = int_to_ptr.hbm [resolvable:$true] %s184
          %s186 = sshll.u32 [#allocation6], 4
          %s187 = int_to_ptr.vmem [resolvable:$true] %s186
          %189 = dma.hbm_to_vmem [thread:$0]  %s185, 16, %s187, [#allocation7]
        $region16: #{tpu_custom_call.1} parent=11 // pred_fallthru
          _
        // Predicated region
        $region17: #{tpu_custom_call.1} parent=11 // pred_check
          %p190 = pneg %p90
        $region18: #{tpu_custom_call.1} parent=11 // pred_check_branch
          %192 = sbr.rel (%p190) target = $region20
        $region19: #{tpu_custom_call.1} parent=11 // pred_region
          _
        $region20: #{tpu_custom_call.1} parent=11 // pred_fallthru
          _
        // Predicated region
        $region21: #{tpu_custom_call.1} parent=11 // pred_check
          %p193 = pneg %p111
        $region22: #{tpu_custom_call.1} parent=11 // pred_check_branch
          %195 = sbr.rel (%p193) target = $region24
        $region23: #{tpu_custom_call.1} parent=11 // pred_region
          %197 = vsyncadd [#allocation7], 0
          %s198 = sshll.u32 %s3, 4
          %s199 = int_to_ptr.hbm [resolvable:$true] %s198
          %s200 = sshll.u32 [#allocation8], 4
          %s201 = int_to_ptr.vmem [resolvable:$true] %s200
          %206 = dma.hbm_to_vmem [thread:$0]  %s199, 18432, %s201, [#allocation7], 128, 128, 8
        $region24: #{tpu_custom_call.1} parent=11 // pred_fallthru
          _
      $region12: #{tpu_custom_call.1} parent=5 // pred_fallthru
        _
      %p207 = scmp.lt.s32.totalorder %s22, 2
      // Predicated region
      $region25: #{tpu_custom_call.1} parent=5 // pred_check
        %p208 = pneg %p207
      $region26: #{tpu_custom_call.1} parent=5 // pred_check_branch
        %210 = sbr.rel (%p208) target = $region28
      $region27: #{tpu_custom_call.1} parent=5 // pred_region
        // Predicated region
        $region29: #{tpu_custom_call.1} parent=27 // pred_check
          %p211 = pneg %p42
        $region30: #{tpu_custom_call.1} parent=27 // pred_check_branch
          %213 = sbr.rel (%p211) target = $region32
        $region31: #{tpu_custom_call.1} parent=27 // pred_region
          %s214 = sand.u32 %s32, 1
          %s215 = scalar_lea.sflag [#allocation4], %s214
          %s216 = sand.u32 %s32, 1
          %s217 = smul.addr %s216, 64
          %s218 = scalar_lea.vmem [#allocation3], %s217
          %220 = vsyncadd %s215, 0
          %s221 = smul.addr %s22, 8
          %s222 = smul.addr %s221, 8
          %s223 = scalar_lea.hbm %s0, %s222
          %s224 = sshll.u32 %s223, 4
          %s225 = int_to_ptr.hbm [resolvable:$true] %s224
          %s226 = sshll.u32 %s218, 4
          %s227 = int_to_ptr.vmem [resolvable:$true] %s226
          %232 = dma.hbm_to_vmem [thread:$0]  %s225, 1024, %s227, %s215, 128, 128, 8
        $region32: #{tpu_custom_call.1} parent=27 // pred_fallthru
          _
      $region28: #{tpu_custom_call.1} parent=5 // pred_fallthru
        _
      %p233 = scmp.le.s32.totalorder 1, %s22
      %p234 = scmp.lt.s32.totalorder %s22, 3
      %p235 = pnand %p233, %p234
      %p236 = pneg %p235
      // Predicated region
      $region33: #{tpu_custom_call.1} parent=5 // pred_check
        _
      $region34: #{tpu_custom_call.1} parent=5 // pred_check_branch
        %238 = sbr.rel (%p235) target = $region36
      $region35: #{tpu_custom_call.1} parent=5 // pred_region
        %s239 = ssub.s32 %s22, 1
        %s240 = sand.u32 %s35, 1
        %s241 = scalar_lea.sflag [#allocation4], %s240
        %s242 = sand.u32 %s35, 1
        %s243 = smul.addr %s242, 64
        %s244 = scalar_lea.vmem [#allocation3], %s243
        // Predicated region
        $region37: #{tpu_custom_call.1} parent=35 // pred_check
          %p245 = pneg %p48
        $region38: #{tpu_custom_call.1} parent=35 // pred_check_branch
          %247 = sbr.rel (%p245) target = $region40
        $region39: #{tpu_custom_call.1} parent=35 // pred_region
          %249 = dma.done %s241, 1024
        $region40: #{tpu_custom_call.1} parent=35 // pred_fallthru
          _
        // Predicated region
        $region41: #{tpu_custom_call.1} parent=35 // pred_check
          %p250 = pneg %p69
        $region42: #{tpu_custom_call.1} parent=35 // pred_check_branch
          %252 = sbr.rel (%p250) target = $region44
        $region43: #{tpu_custom_call.1} parent=35 // pred_region
          %254 = dma.done [#allocation7], 16
        $region44: #{tpu_custom_call.1} parent=35 // pred_fallthru
          _
        // Predicated region
        $region45: #{tpu_custom_call.1} parent=35 // pred_check
          %p255 = pneg %p111
        $region46: #{tpu_custom_call.1} parent=35 // pred_check_branch
          %257 = sbr.rel (%p255) target = $region48
        $region47: #{tpu_custom_call.1} parent=35 // pred_region
          %259 = dma.done [#allocation7], 18432
        $region48: #{tpu_custom_call.1} parent=35 // pred_fallthru
          _
        %s260 = sand.u32 %s35, 1
        %s261 = scalar_lea.sflag [#allocation4], %s260
        %s262 = sand.u32 %s35, 1
        %s263 = smul.addr %s262, 64
        %s264 = scalar_lea.vmem [#allocation3], %s263
        %p265 = pneg %p48
        %p266 = pneg %p45
        %p267 = pneg %p69
        %p268 = pneg %p66
        %p269 = pneg %p90
        %p270 = pneg %p87
        %p271 = pneg %p111
        %p272 = pneg %p108
        %p273 = pneg %p137
        %p274 = pneg %p134
        %s275 = sand.u32 %s124, 1
        %s276 = scalar_lea.sflag [#allocation5], %s275
        %s277 = sand.u32 %s124, 1
        %s278 = smul.addr %s277, 64
        %s279 = scalar_lea.vmem [#allocation9], %s278
        %p280 = pneg %p163
        %p281 = pneg %p160
        %s282 = sand.u32 %s150, 1
        %s283 = scalar_lea.sflag [#allocation11], %s282
        %s284 = sand.u32 %s150, 1
        %s285 = smul.addr %s284, 2
        %s286 = scalar_lea.vmem [#allocation10], %s285
        %v287 = vld [vmem:[%s244] sm:$0xff]
        %v288 = vld [vmem:[%s244 + $0x8] sm:$0xff]
        %v289 = vld [vmem:[%s244 + $0x10] sm:$0xff]
        %v290 = vld [vmem:[%s244 + $0x18] sm:$0xff]
        %v291 = vld [vmem:[%s244 + $0x20] sm:$0xff]
        %v292 = vld [vmem:[%s244 + $0x28] sm:$0xff]
        %v293 = vld [vmem:[%s244 + $0x30] sm:$0xff]
        %v294 = vld [vmem:[%s244 + $0x38] sm:$0xff]
        %v295 = vld [vmem:[#allocation6] sm:$0x1]
        %v297 = vperm.slane %v295, 0
        %v299 = vmul.f32 %v287, %v297
        %v300 = vmul.f32 %v288, %v297
        %v301 = vmul.f32 %v289, %v297
        %v302 = vmul.f32 %v290, %v297
        %v303 = vmul.f32 %v291, %v297
        %v304 = vmul.f32 %v292, %v297
        %v305 = vmul.f32 %v293, %v297
        %v306 = vmul.f32 %v294, %v297
        %v307 = vld [vmem:[%s2] sm:$0x1]
        %v309 = vperm.slane %v307, 0
        %v311 = vadd.f32 %v299, %v309
        %v312 = vadd.f32 %v300, %v309
        %v313 = vadd.f32 %v301, %v309
        %v314 = vadd.f32 %v302, %v309
        %v315 = vadd.f32 %v303, %v309
        %v316 = vadd.f32 %v304, %v309
        %v317 = vadd.f32 %v305, %v309
        %v318 = vadd.f32 %v306, %v309
        %v319 = vmax.f32 %v311, 0.0
        %v320 = vmax.f32 %v312, 0.0
        %v321 = vmax.f32 %v313, 0.0
        %v322 = vmax.f32 %v314, 0.0
        %v323 = vmax.f32 %v315, 0.0
        %v324 = vmax.f32 %v316, 0.0
        %v325 = vmax.f32 %v317, 0.0
        %v326 = vmax.f32 %v318, 0.0
        %327 = vst [vmem:[#allocation2] sm:$0xff] 0.0
        %328 = vst [vmem:[#allocation2 + $0x8] sm:$0x3] 0.0
        %s329 = scalar_lea.vmem [#allocation2], 144
        %330 = vst [vmem:[%s329] sm:$0xff] 0.0
        %331 = vst [vmem:[%s329 + $0x8] sm:$0x3] 0.0
        %s332 = scalar_lea.vmem [#allocation2], 16
        %333 = vst [vmem:[%s332] sm:$0x1] 0.0
        %334 = vst [vmem:[%s332 + $0x10] sm:$0x1] 0.0
        %335 = vst [vmem:[%s332 + $0x20] sm:$0x1] 0.0
        %336 = vst [vmem:[%s332 + $0x30] sm:$0x1] 0.0
        %337 = vst [vmem:[%s332 + $0x40] sm:$0x1] 0.0
        %338 = vst [vmem:[%s332 + $0x50] sm:$0x1] 0.0
        %339 = vst [vmem:[%s332 + $0x60] sm:$0x1] 0.0
        %340 = vst [vmem:[%s332 + $0x70] sm:$0x1] 0.0
        %341 = vst [vmem:[%s332 + $0x9] sm:$0x1] 0.0
        %342 = vst [vmem:[%s332 + $0x19] sm:$0x1] 0.0
        %343 = vst [vmem:[%s332 + $0x29] sm:$0x1] 0.0
        %344 = vst [vmem:[%s332 + $0x39] sm:$0x1] 0.0
        %345 = vst [vmem:[%s332 + $0x49] sm:$0x1] 0.0
        %346 = vst [vmem:[%s332 + $0x59] sm:$0x1] 0.0
        %347 = vst [vmem:[%s332 + $0x69] sm:$0x1] 0.0
        %348 = vst [vmem:[%s332 + $0x79] sm:$0x1] 0.0
        %349 = vst [vmem:[%s332 + $0x1] sm:$0xff] %v319
        %350 = vst [vmem:[%s332 + $0x11] sm:$0xff] %v320
        %351 = vst [vmem:[%s332 + $0x21] sm:$0xff] %v321
        %352 = vst [vmem:[%s332 + $0x31] sm:$0xff] %v322
        %353 = vst [vmem:[%s332 + $0x41] sm:$0xff] %v323
        %354 = vst [vmem:[%s332 + $0x51] sm:$0xff] %v324
        %355 = vst [vmem:[%s332 + $0x61] sm:$0xff] %v325
        %356 = vst [vmem:[%s332 + $0x71] sm:$0xff] %v326
        %v357 = vld [vmem:[#allocation2] sm:$0xff]
        %v358 = vld [vmem:[#allocation2 + $0x10] sm:$0xff]
        %v359 = vld [vmem:[#allocation2 + $0x20] sm:$0xff]
        %v360 = vld [vmem:[#allocation2 + $0x30] sm:$0xff]
        %v361 = vld [vmem:[#allocation2 + $0x40] sm:$0xff]
        %v362 = vld [vmem:[#allocation2 + $0x50] sm:$0xff]
        %v363 = vld [vmem:[#allocation2 + $0x60] sm:$0xff]
        %v364 = vld [vmem:[#allocation2 + $0x70] sm:$0xff]
        %v365 = vld [vmem:[#allocation8] sm:$0xff]
        %v366 = vld [vmem:[#allocation8 + $0x8] sm:$0xff]
        %v367 = vld [vmem:[#allocation8 + $0x10] sm:$0xff]
        %v368 = vld [vmem:[#allocation8 + $0x18] sm:$0xff]
        %v369 = vld [vmem:[#allocation8 + $0x20] sm:$0xff]
        %v370 = vld [vmem:[#allocation8 + $0x28] sm:$0xff]
        %v371 = vld [vmem:[#allocation8 + $0x30] sm:$0xff]
        %v372 = vld [vmem:[#allocation8 + $0x38] sm:$0xff]
        %v373 = vld [vmem:[#allocation8 + $0x40] sm:$0xff]
        %v374 = vld [vmem:[#allocation8 + $0x48] sm:$0xff]
        %v375 = vld [vmem:[#allocation8 + $0x50] sm:$0xff]
        %v376 = vld [vmem:[#allocation8 + $0x58] sm:$0xff]
        %v377 = vld [vmem:[#allocation8 + $0x60] sm:$0xff]
        %v378 = vld [vmem:[#allocation8 + $0x68] sm:$0xff]
        %v379 = vld [vmem:[#allocation8 + $0x70] sm:$0xff]
        %v380 = vld [vmem:[#allocation8 + $0x78] sm:$0xff]
        %v381 = vld [vmem:[#allocation2 + $0x1] sm:$0xff]
        %v382 = vld [vmem:[#allocation2 + $0x11] sm:$0xff]
        %v383 = vld [vmem:[#allocation2 + $0x21] sm:$0xff]
        %v384 = vld [vmem:[#allocation2 + $0x31] sm:$0xff]
        %v385 = vld [vmem:[#allocation2 + $0x41] sm:$0xff]
        %v386 = vld [vmem:[#allocation2 + $0x51] sm:$0xff]
        %v387 = vld [vmem:[#allocation2 + $0x61] sm:$0xff]
        %v388 = vld [vmem:[#allocation2 + $0x71] sm:$0xff]
        %s389 = scalar_lea.vmem [#allocation8], 128
        %v390 = vld [vmem:[%s389] sm:$0xff]
        %v391 = vld [vmem:[%s389 + $0x8] sm:$0xff]
        %v392 = vld [vmem:[%s389 + $0x10] sm:$0xff]
        %v393 = vld [vmem:[%s389 + $0x18] sm:$0xff]
        %v394 = vld [vmem:[%s389 + $0x20] sm:$0xff]
        %v395 = vld [vmem:[%s389 + $0x28] sm:$0xff]
        %v396 = vld [vmem:[%s389 + $0x30] sm:$0xff]
        %v397 = vld [vmem:[%s389 + $0x38] sm:$0xff]
        %v398 = vld [vmem:[%s389 + $0x40] sm:$0xff]
        %v399 = vld [vmem:[%s389 + $0x48] sm:$0xff]
        %v400 = vld [vmem:[%s389 + $0x50] sm:$0xff]
        %v401 = vld [vmem:[%s389 + $0x58] sm:$0xff]
        %v402 = vld [vmem:[%s389 + $0x60] sm:$0xff]
        %v403 = vld [vmem:[%s389 + $0x68] sm:$0xff]
        %v404 = vld [vmem:[%s389 + $0x70] sm:$0xff]
        %v405 = vld [vmem:[%s389 + $0x78] sm:$0xff]
        %406 = vmatpush.msra.mxu0 %v405
        %407 = vmatpush.msra.mxu0 %v404
        %408 = vmatpush.msra.mxu0 %v403
        %409 = vmatpush.msra.mxu0 %v402
        %410 = vmatpush.msra.mxu0 %v401
        %411 = vmatpush.msra.mxu0 %v400
        %412 = vmatpush.msra.mxu0 %v399
        %413 = vmatpush.msra.mxu0 %v398
        %414 = vmatpush.msra.mxu0 %v397
        %415 = vmatpush.msra.mxu0 %v396
        %416 = vmatpush.msra.mxu0 %v395
        %417 = vmatpush.msra.mxu0 %v394
        %418 = vmatpush.msra.mxu0 %v393
        %419 = vmatpush.msra.mxu0 %v392
        %420 = vmatpush.msra.mxu0 %v391
        %421 = vmatpush.msra.mxu0 %v390
        %422 = vmatmul.f32.gmra.mxu0 %v381
        %v423 = vpop.f32.mrf.mxu0
        %v424 = vadd.f32 0.0, %v423
        %425 = vmatmul.f32.gmra.mxu0 %v382
        %v426 = vpop.f32.mrf.mxu0
        %v427 = vadd.f32 0.0, %v426
        %428 = vmatmul.f32.gmra.mxu0 %v383
        %v429 = vpop.f32.mrf.mxu0
        %v430 = vadd.f32 0.0, %v429
        %431 = vmatmul.f32.gmra.mxu0 %v384
        %v432 = vpop.f32.mrf.mxu0
        %v433 = vadd.f32 0.0, %v432
        %434 = vmatmul.f32.gmra.mxu0 %v385
        %v435 = vpop.f32.mrf.mxu0
        %v436 = vadd.f32 0.0, %v435
        %437 = vmatmul.f32.gmra.mxu0 %v386
        %v438 = vpop.f32.mrf.mxu0
        %v439 = vadd.f32 0.0, %v438
        %440 = vmatmul.f32.gmra.mxu0 %v387
        %v441 = vpop.f32.mrf.mxu0
        %v442 = vadd.f32 0.0, %v441
        %443 = vmatmul.f32.gmra.mxu0 %v388
        %v444 = vpop.f32.mrf.mxu0
        %v445 = vadd.f32 0.0, %v444
        %446 = vdwg.mxu0
        %447 = vmatpush.msra.mxu0 %v380
        %448 = vmatpush.msra.mxu0 %v379
        %449 = vmatpush.msra.mxu0 %v378
        %450 = vmatpush.msra.mxu0 %v377
        %451 = vmatpush.msra.mxu0 %v376
        %452 = vmatpush.msra.mxu0 %v375
        %453 = vmatpush.msra.mxu0 %v374
        %454 = vmatpush.msra.mxu0 %v373
        %455 = vmatpush.msra.mxu0 %v372
        %456 = vmatpush.msra.mxu0 %v371
        %457 = vmatpush.msra.mxu0 %v370
        %458 = vmatpush.msra.mxu0 %v369
        %459 = vmatpush.msra.mxu0 %v368
        %460 = vmatpush.msra.mxu0 %v367
        %461 = vmatpush.msra.mxu0 %v366
        %462 = vmatpush.msra.mxu0 %v365
        %463 = vmatmul.f32.gmra.mxu0 %v357
        %v464 = vpop.f32.mrf.mxu0
        %v465 = vadd.f32 %v424, %v464
        %466 = vmatmul.f32.gmra.mxu0 %v358
        %v467 = vpop.f32.mrf.mxu0
        %v468 = vadd.f32 %v427, %v467
        %469 = vmatmul.f32.gmra.mxu0 %v359
        %v470 = vpop.f32.mrf.mxu0
        %v471 = vadd.f32 %v430, %v470
        %472 = vmatmul.f32.gmra.mxu0 %v360
        %v473 = vpop.f32.mrf.mxu0
        %v474 = vadd.f32 %v433, %v473
        %475 = vmatmul.f32.gmra.mxu0 %v361
        %v476 = vpop.f32.mrf.mxu0
        %v477 = vadd.f32 %v436, %v476
        %478 = vmatmul.f32.gmra.mxu0 %v362
        %v479 = vpop.f32.mrf.mxu0
        %v480 = vadd.f32 %v439, %v479
        %481 = vmatmul.f32.gmra.mxu0 %v363
        %v482 = vpop.f32.mrf.mxu0
        %v483 = vadd.f32 %v442, %v482
        %484 = vmatmul.f32.gmra.mxu0 %v364
        %v485 = vpop.f32.mrf.mxu0
        %v486 = vadd.f32 %v445, %v485
        %487 = vdwg.mxu0
        %v488 = vld [vmem:[#allocation2 + $0x2] sm:$0xff]
        %v489 = vld [vmem:[#allocation2 + $0x12] sm:$0xff]
        %v490 = vld [vmem:[#allocation2 + $0x22] sm:$0xff]
        %v491 = vld [vmem:[#allocation2 + $0x32] sm:$0xff]
        %v492 = vld [vmem:[#allocation2 + $0x42] sm:$0xff]
        %v493 = vld [vmem:[#allocation2 + $0x52] sm:$0xff]
        %v494 = vld [vmem:[#allocation2 + $0x62] sm:$0xff]
        %v495 = vld [vmem:[#allocation2 + $0x72] sm:$0xff]
        %s496 = scalar_lea.vmem [#allocation8], 256
        %v497 = vld [vmem:[%s496] sm:$0xff]
        %v498 = vld [vmem:[%s496 + $0x8] sm:$0xff]
        %v499 = vld [vmem:[%s496 + $0x10] sm:$0xff]
        %v500 = vld [vmem:[%s496 + $0x18] sm:$0xff]
        %v501 = vld [vmem:[%s496 + $0x20] sm:$0xff]
        %v502 = vld [vmem:[%s496 + $0x28] sm:$0xff]
        %v503 = vld [vmem:[%s496 + $0x30] sm:$0xff]
        %v504 = vld [vmem:[%s496 + $0x38] sm:$0xff]
        %v505 = vld [vmem:[%s496 + $0x40] sm:$0xff]
        %v506 = vld [vmem:[%s496 + $0x48] sm:$0xff]
        %v507 = vld [vmem:[%s496 + $0x50] sm:$0xff]
        %v508 = vld [vmem:[%s496 + $0x58] sm:$0xff]
        %v509 = vld [vmem:[%s496 + $0x60] sm:$0xff]
        %v510 = vld [vmem:[%s496 + $0x68] sm:$0xff]
        %v511 = vld [vmem:[%s496 + $0x70] sm:$0xff]
        %v512 = vld [vmem:[%s496 + $0x78] sm:$0xff]
        %513 = vmatpush.msra.mxu0 %v512
        %514 = vmatpush.msra.mxu0 %v511
        %515 = vmatpush.msra.mxu0 %v510
        %516 = vmatpush.msra.mxu0 %v509
        %517 = vmatpush.msra.mxu0 %v508
        %518 = vmatpush.msra.mxu0 %v507
        %519 = vmatpush.msra.mxu0 %v506
        %520 = vmatpush.msra.mxu0 %v505
        %521 = vmatpush.msra.mxu0 %v504
        %522 = vmatpush.msra.mxu0 %v503
        %523 = vmatpush.msra.mxu0 %v502
        %524 = vmatpush.msra.mxu0 %v501
        %525 = vmatpush.msra.mxu0 %v500
        %526 = vmatpush.msra.mxu0 %v499
        %527 = vmatpush.msra.mxu0 %v498
        %528 = vmatpush.msra.mxu0 %v497
        %529 = vmatmul.f32.gmra.mxu0 %v488
        %v530 = vpop.f32.mrf.mxu0
        %v531 = vadd.f32 0.0, %v530
        %532 = vmatmul.f32.gmra.mxu0 %v489
        %v533 = vpop.f32.mrf.mxu0
        %v534 = vadd.f32 0.0, %v533
        %535 = vmatmul.f32.gmra.mxu0 %v490
        %v536 = vpop.f32.mrf.mxu0
        %v537 = vadd.f32 0.0, %v536
        %538 = vmatmul.f32.gmra.mxu0 %v491
        %v539 = vpop.f32.mrf.mxu0
        %v540 = vadd.f32 0.0, %v539
        %541 = vmatmul.f32.gmra.mxu0 %v492
        %v542 = vpop.f32.mrf.mxu0
        %v543 = vadd.f32 0.0, %v542
        %544 = vmatmul.f32.gmra.mxu0 %v493
        %v545 = vpop.f32.mrf.mxu0
        %v546 = vadd.f32 0.0, %v545
        %547 = vmatmul.f32.gmra.mxu0 %v494
        %v548 = vpop.f32.mrf.mxu0
        %v549 = vadd.f32 0.0, %v548
        %550 = vmatmul.f32.gmra.mxu0 %v495
        %v551 = vpop.f32.mrf.mxu0
        %v552 = vadd.f32 0.0, %v551
        %553 = vdwg.mxu0
        %v554 = vadd.f32 %v465, %v531
        %v555 = vadd.f32 %v468, %v534
        %v556 = vadd.f32 %v471, %v537
        %v557 = vadd.f32 %v474, %v540
        %v558 = vadd.f32 %v477, %v543
        %v559 = vadd.f32 %v480, %v546
        %v560 = vadd.f32 %v483, %v549
        %v561 = vadd.f32 %v486, %v552
        %v562 = vld [vmem:[%s332] sm:$0xff]
        %v563 = vld [vmem:[%s332 + $0x10] sm:$0xff]
        %v564 = vld [vmem:[%s332 + $0x20] sm:$0xff]
        %v565 = vld [vmem:[%s332 + $0x30] sm:$0xff]
        %v566 = vld [vmem:[%s332 + $0x40] sm:$0xff]
        %v567 = vld [vmem:[%s332 + $0x50] sm:$0xff]
        %v568 = vld [vmem:[%s332 + $0x60] sm:$0xff]
        %v569 = vld [vmem:[%s332 + $0x70] sm:$0xff]
        %s570 = scalar_lea.vmem [#allocation8], 384
        %v571 = vld [vmem:[%s570] sm:$0xff]
        %v572 = vld [vmem:[%s570 + $0x8] sm:$0xff]
        %v573 = vld [vmem:[%s570 + $0x10] sm:$0xff]
        %v574 = vld [vmem:[%s570 + $0x18] sm:$0xff]
        %v575 = vld [vmem:[%s570 + $0x20] sm:$0xff]
        %v576 = vld [vmem:[%s570 + $0x28] sm:$0xff]
        %v577 = vld [vmem:[%s570 + $0x30] sm:$0xff]
        %v578 = vld [vmem:[%s570 + $0x38] sm:$0xff]
        %v579 = vld [vmem:[%s570 + $0x40] sm:$0xff]
        %v580 = vld [vmem:[%s570 + $0x48] sm:$0xff]
        %v581 = vld [vmem:[%s570 + $0x50] sm:$0xff]
        %v582 = vld [vmem:[%s570 + $0x58] sm:$0xff]
        %v583 = vld [vmem:[%s570 + $0x60] sm:$0xff]
        %v584 = vld [vmem:[%s570 + $0x68] sm:$0xff]
        %v585 = vld [vmem:[%s570 + $0x70] sm:$0xff]
        %v586 = vld [vmem:[%s570 + $0x78] sm:$0xff]
        %587 = vmatpush.msra.mxu0 %v586
        %588 = vmatpush.msra.mxu0 %v585
        %589 = vmatpush.msra.mxu0 %v584
        %590 = vmatpush.msra.mxu0 %v583
        %591 = vmatpush.msra.mxu0 %v582
        %592 = vmatpush.msra.mxu0 %v581
        %593 = vmatpush.msra.mxu0 %v580
        %594 = vmatpush.msra.mxu0 %v579
        %595 = vmatpush.msra.mxu0 %v578
        %596 = vmatpush.msra.mxu0 %v577
        %597 = vmatpush.msra.mxu0 %v576
        %598 = vmatpush.msra.mxu0 %v575
        %599 = vmatpush.msra.mxu0 %v574
        %600 = vmatpush.msra.mxu0 %v573
        %601 = vmatpush.msra.mxu0 %v572
        %602 = vmatpush.msra.mxu0 %v571
        %603 = vmatmul.f32.gmra.mxu0 %v562
        %v604 = vpop.f32.mrf.mxu0
        %v605 = vadd.f32 0.0, %v604
        %606 = vmatmul.f32.gmra.mxu0 %v563
        %v607 = vpop.f32.mrf.mxu0
        %v608 = vadd.f32 0.0, %v607
        %609 = vmatmul.f32.gmra.mxu0 %v564
        %v610 = vpop.f32.mrf.mxu0
        %v611 = vadd.f32 0.0, %v610
        %612 = vmatmul.f32.gmra.mxu0 %v565
        %v613 = vpop.f32.mrf.mxu0
        %v614 = vadd.f32 0.0, %v613
        %615 = vmatmul.f32.gmra.mxu0 %v566
        %v616 = vpop.f32.mrf.mxu0
        %v617 = vadd.f32 0.0, %v616
        %618 = vmatmul.f32.gmra.mxu0 %v567
        %v619 = vpop.f32.mrf.mxu0
        %v620 = vadd.f32 0.0, %v619
        %621 = vmatmul.f32.gmra.mxu0 %v568
        %v622 = vpop.f32.mrf.mxu0
        %v623 = vadd.f32 0.0, %v622
        %624 = vmatmul.f32.gmra.mxu0 %v569
        %v625 = vpop.f32.mrf.mxu0
        %v626 = vadd.f32 0.0, %v625
        %627 = vdwg.mxu0
        %v628 = vadd.f32 %v554, %v605
        %v629 = vadd.f32 %v555, %v608
        %v630 = vadd.f32 %v556, %v611
        %v631 = vadd.f32 %v557, %v614
        %v632 = vadd.f32 %v558, %v617
        %v633 = vadd.f32 %v559, %v620
        %v634 = vadd.f32 %v560, %v623
        %v635 = vadd.f32 %v561, %v626
        %v636 = vld [vmem:[%s332 + $0x1] sm:$0xff]
        %v637 = vld [vmem:[%s332 + $0x11] sm:$0xff]
        %v638 = vld [vmem:[%s332 + $0x21] sm:$0xff]
        %v639 = vld [vmem:[%s332 + $0x31] sm:$0xff]
        %v640 = vld [vmem:[%s332 + $0x41] sm:$0xff]
        %v641 = vld [vmem:[%s332 + $0x51] sm:$0xff]
        %v642 = vld [vmem:[%s332 + $0x61] sm:$0xff]
        %v643 = vld [vmem:[%s332 + $0x71] sm:$0xff]
        %s644 = scalar_lea.vmem [#allocation8], 512
        %v645 = vld [vmem:[%s644] sm:$0xff]
        %v646 = vld [vmem:[%s644 + $0x8] sm:$0xff]
        %v647 = vld [vmem:[%s644 + $0x10] sm:$0xff]
        %v648 = vld [vmem:[%s644 + $0x18] sm:$0xff]
        %v649 = vld [vmem:[%s644 + $0x20] sm:$0xff]
        %v650 = vld [vmem:[%s644 + $0x28] sm:$0xff]
        %v651 = vld [vmem:[%s644 + $0x30] sm:$0xff]
        %v652 = vld [vmem:[%s644 + $0x38] sm:$0xff]
        %v653 = vld [vmem:[%s644 + $0x40] sm:$0xff]
        %v654 = vld [vmem:[%s644 + $0x48] sm:$0xff]
        %v655 = vld [vmem:[%s644 + $0x50] sm:$0xff]
        %v656 = vld [vmem:[%s644 + $0x58] sm:$0xff]
        %v657 = vld [vmem:[%s644 + $0x60] sm:$0xff]
        %v658 = vld [vmem:[%s644 + $0x68] sm:$0xff]
        %v659 = vld [vmem:[%s644 + $0x70] sm:$0xff]
        %v660 = vld [vmem:[%s644 + $0x78] sm:$0xff]
        %661 = vmatpush.msra.mxu0 %v660
        %662 = vmatpush.msra.mxu0 %v659
        %663 = vmatpush.msra.mxu0 %v658
        %664 = vmatpush.msra.mxu0 %v657
        %665 = vmatpush.msra.mxu0 %v656
        %666 = vmatpush.msra.mxu0 %v655
        %667 = vmatpush.msra.mxu0 %v654
        %668 = vmatpush.msra.mxu0 %v653
        %669 = vmatpush.msra.mxu0 %v652
        %670 = vmatpush.msra.mxu0 %v651
        %671 = vmatpush.msra.mxu0 %v650
        %672 = vmatpush.msra.mxu0 %v649
        %673 = vmatpush.msra.mxu0 %v648
        %674 = vmatpush.msra.mxu0 %v647
        %675 = vmatpush.msra.mxu0 %v646
        %676 = vmatpush.msra.mxu0 %v645
        %677 = vmatmul.f32.gmra.mxu0 %v636
        %v678 = vpop.f32.mrf.mxu0
        %v679 = vadd.f32 0.0, %v678
        %680 = vmatmul.f32.gmra.mxu0 %v637
        %v681 = vpop.f32.mrf.mxu0
        %v682 = vadd.f32 0.0, %v681
        %683 = vmatmul.f32.gmra.mxu0 %v638
        %v684 = vpop.f32.mrf.mxu0
        %v685 = vadd.f32 0.0, %v684
        %686 = vmatmul.f32.gmra.mxu0 %v639
        %v687 = vpop.f32.mrf.mxu0
        %v688 = vadd.f32 0.0, %v687
        %689 = vmatmul.f32.gmra.mxu0 %v640
        %v690 = vpop.f32.mrf.mxu0
        %v691 = vadd.f32 0.0, %v690
        %692 = vmatmul.f32.gmra.mxu0 %v641
        %v693 = vpop.f32.mrf.mxu0
        %v694 = vadd.f32 0.0, %v693
        %695 = vmatmul.f32.gmra.mxu0 %v642
        %v696 = vpop.f32.mrf.mxu0
        %v697 = vadd.f32 0.0, %v696
        %698 = vmatmul.f32.gmra.mxu0 %v643
        %v699 = vpop.f32.mrf.mxu0
        %v700 = vadd.f32 0.0, %v699
        %701 = vdwg.mxu0
        %v702 = vadd.f32 %v628, %v679
        %v703 = vadd.f32 %v629, %v682
        %v704 = vadd.f32 %v630, %v685
        %v705 = vadd.f32 %v631, %v688
        %v706 = vadd.f32 %v632, %v691
        %v707 = vadd.f32 %v633, %v694
        %v708 = vadd.f32 %v634, %v697
        %v709 = vadd.f32 %v635, %v700
        %v710 = vld [vmem:[%s332 + $0x2] sm:$0xff]
        %v711 = vld [vmem:[%s332 + $0x12] sm:$0xff]
        %v712 = vld [vmem:[%s332 + $0x22] sm:$0xff]
        %v713 = vld [vmem:[%s332 + $0x32] sm:$0xff]
        %v714 = vld [vmem:[%s332 + $0x42] sm:$0xff]
        %v715 = vld [vmem:[%s332 + $0x52] sm:$0xff]
        %v716 = vld [vmem:[%s332 + $0x62] sm:$0xff]
        %v717 = vld [vmem:[%s332 + $0x72] sm:$0xff]
        %s718 = scalar_lea.vmem [#allocation8], 640
        %v719 = vld [vmem:[%s718] sm:$0xff]
        %v720 = vld [vmem:[%s718 + $0x8] sm:$0xff]
        %v721 = vld [vmem:[%s718 + $0x10] sm:$0xff]
        %v722 = vld [vmem:[%s718 + $0x18] sm:$0xff]
        %v723 = vld [vmem:[%s718 + $0x20] sm:$0xff]
        %v724 = vld [vmem:[%s718 + $0x28] sm:$0xff]
        %v725 = vld [vmem:[%s718 + $0x30] sm:$0xff]
        %v726 = vld [vmem:[%s718 + $0x38] sm:$0xff]
        %v727 = vld [vmem:[%s718 + $0x40] sm:$0xff]
        %v728 = vld [vmem:[%s718 + $0x48] sm:$0xff]
        %v729 = vld [vmem:[%s718 + $0x50] sm:$0xff]
        %v730 = vld [vmem:[%s718 + $0x58] sm:$0xff]
        %v731 = vld [vmem:[%s718 + $0x60] sm:$0xff]
        %v732 = vld [vmem:[%s718 + $0x68] sm:$0xff]
        %v733 = vld [vmem:[%s718 + $0x70] sm:$0xff]
        %v734 = vld [vmem:[%s718 + $0x78] sm:$0xff]
        %735 = vmatpush.msra.mxu0 %v734
        %736 = vmatpush.msra.mxu0 %v733
        %737 = vmatpush.msra.mxu0 %v732
        %738 = vmatpush.msra.mxu0 %v731
        %739 = vmatpush.msra.mxu0 %v730
        %740 = vmatpush.msra.mxu0 %v729
        %741 = vmatpush.msra.mxu0 %v728
        %742 = vmatpush.msra.mxu0 %v727
        %743 = vmatpush.msra.mxu0 %v726
        %744 = vmatpush.msra.mxu0 %v725
        %745 = vmatpush.msra.mxu0 %v724
        %746 = vmatpush.msra.mxu0 %v723
        %747 = vmatpush.msra.mxu0 %v722
        %748 = vmatpush.msra.mxu0 %v721
        %749 = vmatpush.msra.mxu0 %v720
        %750 = vmatpush.msra.mxu0 %v719
        %751 = vmatmul.f32.gmra.mxu0 %v710
        %v752 = vpop.f32.mrf.mxu0
        %v753 = vadd.f32 0.0, %v752
        %754 = vmatmul.f32.gmra.mxu0 %v711
        %v755 = vpop.f32.mrf.mxu0
        %v756 = vadd.f32 0.0, %v755
        %757 = vmatmul.f32.gmra.mxu0 %v712
        %v758 = vpop.f32.mrf.mxu0
        %v759 = vadd.f32 0.0, %v758
        %760 = vmatmul.f32.gmra.mxu0 %v713
        %v761 = vpop.f32.mrf.mxu0
        %v762 = vadd.f32 0.0, %v761
        %763 = vmatmul.f32.gmra.mxu0 %v714
        %v764 = vpop.f32.mrf.mxu0
        %v765 = vadd.f32 0.0, %v764
        %766 = vmatmul.f32.gmra.mxu0 %v715
        %v767 = vpop.f32.mrf.mxu0
        %v768 = vadd.f32 0.0, %v767
        %769 = vmatmul.f32.gmra.mxu0 %v716
        %v770 = vpop.f32.mrf.mxu0
        %v771 = vadd.f32 0.0, %v770
        %772 = vmatmul.f32.gmra.mxu0 %v717
        %v773 = vpop.f32.mrf.mxu0
        %v774 = vadd.f32 0.0, %v773
        %775 = vdwg.mxu0
        %v776 = vadd.f32 %v702, %v753
        %v777 = vadd.f32 %v703, %v756
        %v778 = vadd.f32 %v704, %v759
        %v779 = vadd.f32 %v705, %v762
        %v780 = vadd.f32 %v706, %v765
        %v781 = vadd.f32 %v707, %v768
        %v782 = vadd.f32 %v708, %v771
        %v783 = vadd.f32 %v709, %v774
        %s784 = scalar_lea.vmem [#allocation2], 32
        %v785 = vld [vmem:[%s784] sm:$0xff]
        %v786 = vld [vmem:[%s784 + $0x10] sm:$0xff]
        %v787 = vld [vmem:[%s784 + $0x20] sm:$0xff]
        %v788 = vld [vmem:[%s784 + $0x30] sm:$0xff]
        %v789 = vld [vmem:[%s784 + $0x40] sm:$0xff]
        %v790 = vld [vmem:[%s784 + $0x50] sm:$0xff]
        %v791 = vld [vmem:[%s784 + $0x60] sm:$0xff]
        %v792 = vld [vmem:[%s784 + $0x70] sm:$0xff]
        %s793 = scalar_lea.vmem [#allocation8], 768
        %v794 = vld [vmem:[%s793] sm:$0xff]
        %v795 = vld [vmem:[%s793 + $0x8] sm:$0xff]
        %v796 = vld [vmem:[%s793 + $0x10] sm:$0xff]
        %v797 = vld [vmem:[%s793 + $0x18] sm:$0xff]
        %v798 = vld [vmem:[%s793 + $0x20] sm:$0xff]
        %v799 = vld [vmem:[%s793 + $0x28] sm:$0xff]
        %v800 = vld [vmem:[%s793 + $0x30] sm:$0xff]
        %v801 = vld [vmem:[%s793 + $0x38] sm:$0xff]
        %v802 = vld [vmem:[%s793 + $0x40] sm:$0xff]
        %v803 = vld [vmem:[%s793 + $0x48] sm:$0xff]
        %v804 = vld [vmem:[%s793 + $0x50] sm:$0xff]
        %v805 = vld [vmem:[%s793 + $0x58] sm:$0xff]
        %v806 = vld [vmem:[%s793 + $0x60] sm:$0xff]
        %v807 = vld [vmem:[%s793 + $0x68] sm:$0xff]
        %v808 = vld [vmem:[%s793 + $0x70] sm:$0xff]
        %v809 = vld [vmem:[%s793 + $0x78] sm:$0xff]
        %810 = vmatpush.msra.mxu0 %v809
        %811 = vmatpush.msra.mxu0 %v808
        %812 = vmatpush.msra.mxu0 %v807
        %813 = vmatpush.msra.mxu0 %v806
        %814 = vmatpush.msra.mxu0 %v805
        %815 = vmatpush.msra.mxu0 %v804
        %816 = vmatpush.msra.mxu0 %v803
        %817 = vmatpush.msra.mxu0 %v802
        %818 = vmatpush.msra.mxu0 %v801
        %819 = vmatpush.msra.mxu0 %v800
        %820 = vmatpush.msra.mxu0 %v799
        %821 = vmatpush.msra.mxu0 %v798
        %822 = vmatpush.msra.mxu0 %v797
        %823 = vmatpush.msra.mxu0 %v796
        %824 = vmatpush.msra.mxu0 %v795
        %825 = vmatpush.msra.mxu0 %v794
        %826 = vmatmul.f32.gmra.mxu0 %v785
        %v827 = vpop.f32.mrf.mxu0
        %v828 = vadd.f32 0.0, %v827
        %829 = vmatmul.f32.gmra.mxu0 %v786
        %v830 = vpop.f32.mrf.mxu0
        %v831 = vadd.f32 0.0, %v830
        %832 = vmatmul.f32.gmra.mxu0 %v787
        %v833 = vpop.f32.mrf.mxu0
        %v834 = vadd.f32 0.0, %v833
        %835 = vmatmul.f32.gmra.mxu0 %v788
        %v836 = vpop.f32.mrf.mxu0
        %v837 = vadd.f32 0.0, %v836
        %838 = vmatmul.f32.gmra.mxu0 %v789
        %v839 = vpop.f32.mrf.mxu0
        %v840 = vadd.f32 0.0, %v839
        %841 = vmatmul.f32.gmra.mxu0 %v790
        %v842 = vpop.f32.mrf.mxu0
        %v843 = vadd.f32 0.0, %v842
        %844 = vmatmul.f32.gmra.mxu0 %v791
        %v845 = vpop.f32.mrf.mxu0
        %v846 = vadd.f32 0.0, %v845
        %847 = vmatmul.f32.gmra.mxu0 %v792
        %v848 = vpop.f32.mrf.mxu0
        %v849 = vadd.f32 0.0, %v848
        %850 = vdwg.mxu0
        %v851 = vadd.f32 %v776, %v828
        %v852 = vadd.f32 %v777, %v831
        %v853 = vadd.f32 %v778, %v834
        %v854 = vadd.f32 %v779, %v837
        %v855 = vadd.f32 %v780, %v840
        %v856 = vadd.f32 %v781, %v843
        %v857 = vadd.f32 %v782, %v846
        %v858 = vadd.f32 %v783, %v849
        %v859 = vld [vmem:[%s784 + $0x1] sm:$0xff]
        %v860 = vld [vmem:[%s784 + $0x11] sm:$0xff]
        %v861 = vld [vmem:[%s784 + $0x21] sm:$0xff]
        %v862 = vld [vmem:[%s784 + $0x31] sm:$0xff]
        %v863 = vld [vmem:[%s784 + $0x41] sm:$0xff]
        %v864 = vld [vmem:[%s784 + $0x51] sm:$0xff]
        %v865 = vld [vmem:[%s784 + $0x61] sm:$0xff]
        %v866 = vld [vmem:[%s784 + $0x71] sm:$0xff]
        %s867 = scalar_lea.vmem [#allocation8], 896
        %v868 = vld [vmem:[%s867] sm:$0xff]
        %v869 = vld [vmem:[%s867 + $0x8] sm:$0xff]
        %v870 = vld [vmem:[%s867 + $0x10] sm:$0xff]
        %v871 = vld [vmem:[%s867 + $0x18] sm:$0xff]
        %v872 = vld [vmem:[%s867 + $0x20] sm:$0xff]
        %v873 = vld [vmem:[%s867 + $0x28] sm:$0xff]
        %v874 = vld [vmem:[%s867 + $0x30] sm:$0xff]
        %v875 = vld [vmem:[%s867 + $0x38] sm:$0xff]
        %v876 = vld [vmem:[%s867 + $0x40] sm:$0xff]
        %v877 = vld [vmem:[%s867 + $0x48] sm:$0xff]
        %v878 = vld [vmem:[%s867 + $0x50] sm:$0xff]
        %v879 = vld [vmem:[%s867 + $0x58] sm:$0xff]
        %v880 = vld [vmem:[%s867 + $0x60] sm:$0xff]
        %v881 = vld [vmem:[%s867 + $0x68] sm:$0xff]
        %v882 = vld [vmem:[%s867 + $0x70] sm:$0xff]
        %v883 = vld [vmem:[%s867 + $0x78] sm:$0xff]
        %884 = vmatpush.msra.mxu0 %v883
        %885 = vmatpush.msra.mxu0 %v882
        %886 = vmatpush.msra.mxu0 %v881
        %887 = vmatpush.msra.mxu0 %v880
        %888 = vmatpush.msra.mxu0 %v879
        %889 = vmatpush.msra.mxu0 %v878
        %890 = vmatpush.msra.mxu0 %v877
        %891 = vmatpush.msra.mxu0 %v876
        %892 = vmatpush.msra.mxu0 %v875
        %893 = vmatpush.msra.mxu0 %v874
        %894 = vmatpush.msra.mxu0 %v873
        %895 = vmatpush.msra.mxu0 %v872
        %896 = vmatpush.msra.mxu0 %v871
        %897 = vmatpush.msra.mxu0 %v870
        %898 = vmatpush.msra.mxu0 %v869
        %899 = vmatpush.msra.mxu0 %v868
        %900 = vmatmul.f32.gmra.mxu0 %v859
        %v901 = vpop.f32.mrf.mxu0
        %v902 = vadd.f32 0.0, %v901
        %903 = vmatmul.f32.gmra.mxu0 %v860
        %v904 = vpop.f32.mrf.mxu0
        %v905 = vadd.f32 0.0, %v904
        %906 = vmatmul.f32.gmra.mxu0 %v861
        %v907 = vpop.f32.mrf.mxu0
        %v908 = vadd.f32 0.0, %v907
        %909 = vmatmul.f32.gmra.mxu0 %v862
        %v910 = vpop.f32.mrf.mxu0
        %v911 = vadd.f32 0.0, %v910
        %912 = vmatmul.f32.gmra.mxu0 %v863
        %v913 = vpop.f32.mrf.mxu0
        %v914 = vadd.f32 0.0, %v913
        %915 = vmatmul.f32.gmra.mxu0 %v864
        %v916 = vpop.f32.mrf.mxu0
        %v917 = vadd.f32 0.0, %v916
        %918 = vmatmul.f32.gmra.mxu0 %v865
        %v919 = vpop.f32.mrf.mxu0
        %v920 = vadd.f32 0.0, %v919
        %921 = vmatmul.f32.gmra.mxu0 %v866
        %v922 = vpop.f32.mrf.mxu0
        %v923 = vadd.f32 0.0, %v922
        %924 = vdwg.mxu0
        %v925 = vadd.f32 %v851, %v902
        %v926 = vadd.f32 %v852, %v905
        %v927 = vadd.f32 %v853, %v908
        %v928 = vadd.f32 %v854, %v911
        %v929 = vadd.f32 %v855, %v914
        %v930 = vadd.f32 %v856, %v917
        %v931 = vadd.f32 %v857, %v920
        %v932 = vadd.f32 %v858, %v923
        %v933 = vld [vmem:[%s784 + $0x2] sm:$0xff]
        %v934 = vld [vmem:[%s784 + $0x12] sm:$0xff]
        %v935 = vld [vmem:[%s784 + $0x22] sm:$0xff]
        %v936 = vld [vmem:[%s784 + $0x32] sm:$0xff]
        %v937 = vld [vmem:[%s784 + $0x42] sm:$0xff]
        %v938 = vld [vmem:[%s784 + $0x52] sm:$0xff]
        %v939 = vld [vmem:[%s784 + $0x62] sm:$0xff]
        %v940 = vld [vmem:[%s784 + $0x72] sm:$0xff]
        %s941 = scalar_lea.vmem [#allocation8], 1024
        %v942 = vld [vmem:[%s941] sm:$0xff]
        %v943 = vld [vmem:[%s941 + $0x8] sm:$0xff]
        %v944 = vld [vmem:[%s941 + $0x10] sm:$0xff]
        %v945 = vld [vmem:[%s941 + $0x18] sm:$0xff]
        %v946 = vld [vmem:[%s941 + $0x20] sm:$0xff]
        %v947 = vld [vmem:[%s941 + $0x28] sm:$0xff]
        %v948 = vld [vmem:[%s941 + $0x30] sm:$0xff]
        %v949 = vld [vmem:[%s941 + $0x38] sm:$0xff]
        %v950 = vld [vmem:[%s941 + $0x40] sm:$0xff]
        %v951 = vld [vmem:[%s941 + $0x48] sm:$0xff]
        %v952 = vld [vmem:[%s941 + $0x50] sm:$0xff]
        %v953 = vld [vmem:[%s941 + $0x58] sm:$0xff]
        %v954 = vld [vmem:[%s941 + $0x60] sm:$0xff]
        %v955 = vld [vmem:[%s941 + $0x68] sm:$0xff]
        %v956 = vld [vmem:[%s941 + $0x70] sm:$0xff]
        %v957 = vld [vmem:[%s941 + $0x78] sm:$0xff]
        %958 = vmatpush.msra.mxu0 %v957
        %959 = vmatpush.msra.mxu0 %v956
        %960 = vmatpush.msra.mxu0 %v955
        %961 = vmatpush.msra.mxu0 %v954
        %962 = vmatpush.msra.mxu0 %v953
        %963 = vmatpush.msra.mxu0 %v952
        %964 = vmatpush.msra.mxu0 %v951
        %965 = vmatpush.msra.mxu0 %v950
        %966 = vmatpush.msra.mxu0 %v949
        %967 = vmatpush.msra.mxu0 %v948
        %968 = vmatpush.msra.mxu0 %v947
        %969 = vmatpush.msra.mxu0 %v946
        %970 = vmatpush.msra.mxu0 %v945
        %971 = vmatpush.msra.mxu0 %v944
        %972 = vmatpush.msra.mxu0 %v943
        %973 = vmatpush.msra.mxu0 %v942
        %974 = vmatmul.f32.gmra.mxu0 %v933
        %v975 = vpop.f32.mrf.mxu0
        %v976 = vadd.f32 0.0, %v975
        %977 = vmatmul.f32.gmra.mxu0 %v934
        %v978 = vpop.f32.mrf.mxu0
        %v979 = vadd.f32 0.0, %v978
        %980 = vmatmul.f32.gmra.mxu0 %v935
        %v981 = vpop.f32.mrf.mxu0
        %v982 = vadd.f32 0.0, %v981
        %983 = vmatmul.f32.gmra.mxu0 %v936
        %v984 = vpop.f32.mrf.mxu0
        %v985 = vadd.f32 0.0, %v984
        %986 = vmatmul.f32.gmra.mxu0 %v937
        %v987 = vpop.f32.mrf.mxu0
        %v988 = vadd.f32 0.0, %v987
        %989 = vmatmul.f32.gmra.mxu0 %v938
        %v990 = vpop.f32.mrf.mxu0
        %v991 = vadd.f32 0.0, %v990
        %992 = vmatmul.f32.gmra.mxu0 %v939
        %v993 = vpop.f32.mrf.mxu0
        %v994 = vadd.f32 0.0, %v993
        %995 = vmatmul.f32.gmra.mxu0 %v940
        %v996 = vpop.f32.mrf.mxu0
        %v997 = vadd.f32 0.0, %v996
        %998 = vdwg.mxu0
        %v999 = vadd.f32 %v925, %v976
        %v1000 = vadd.f32 %v926, %v979
        %v1001 = vadd.f32 %v927, %v982
        %v1002 = vadd.f32 %v928, %v985
        %v1003 = vadd.f32 %v929, %v988
        %v1004 = vadd.f32 %v930, %v991
        %v1005 = vadd.f32 %v931, %v994
        %v1006 = vadd.f32 %v932, %v997
        %1007 = vst [vmem:[%s279] sm:$0xff] %v999
        %1008 = vst [vmem:[%s279 + $0x8] sm:$0xff] %v1000
        %1009 = vst [vmem:[%s279 + $0x10] sm:$0xff] %v1001
        %1010 = vst [vmem:[%s279 + $0x18] sm:$0xff] %v1002
        %1011 = vst [vmem:[%s279 + $0x20] sm:$0xff] %v1003
        %1012 = vst [vmem:[%s279 + $0x28] sm:$0xff] %v1004
        %1013 = vst [vmem:[%s279 + $0x30] sm:$0xff] %v1005
        %1014 = vst [vmem:[%s279 + $0x38] sm:$0xff] %v1006
        %v1015 = vadd.f32 %v999, %v1000
        %v1016 = vadd.f32 %v1015, %v1001
        %v1017 = vadd.f32 %v1016, %v1002
        %v1018 = vadd.f32 %v1017, %v1003
        %v1019 = vadd.f32 %v1018, %v1004
        %v1020 = vadd.f32 %v1019, %v1005
        %v1021 = vadd.f32 %v1020, %v1006
        %v1022 = vrot.slane %v1021, 4
        %v1023 = vadd.f32 %v1021, %v1022
        %v1024 = vrot.slane %v1023, 2
        %v1025 = vadd.f32 %v1023, %v1024
        %v1026 = vrot.slane %v1025, 1
        %v1027 = vadd.f32 %v1025, %v1026
        %1028 = vst [vmem:[%s286] sm:$0x1] %v1027
        %v1029 = vmul.f32 %v999, %v999
        %v1030 = vmul.f32 %v1000, %v1000
        %v1031 = vmul.f32 %v1001, %v1001
        %v1032 = vmul.f32 %v1002, %v1002
        %v1033 = vmul.f32 %v1003, %v1003
        %v1034 = vmul.f32 %v1004, %v1004
        %v1035 = vmul.f32 %v1005, %v1005
        %v1036 = vmul.f32 %v1006, %v1006
        %v1037 = vadd.f32 %v1029, %v1030
        %v1038 = vadd.f32 %v1037, %v1031
        %v1039 = vadd.f32 %v1038, %v1032
        %v1040 = vadd.f32 %v1039, %v1033
        %v1041 = vadd.f32 %v1040, %v1034
        %v1042 = vadd.f32 %v1041, %v1035
        %v1043 = vadd.f32 %v1042, %v1036
        %v1044 = vrot.slane %v1043, 4
        %v1045 = vadd.f32 %v1043, %v1044
        %v1046 = vrot.slane %v1045, 2
        %v1047 = vadd.f32 %v1045, %v1046
        %v1048 = vrot.slane %v1047, 1
        %v1049 = vadd.f32 %v1047, %v1048
        %1050 = vst [vmem:[%s286 + $0x1] sm:$0x1] %v1049
        %s1051 = sand.u32 %s124, 1
        %s1052 = scalar_lea.sflag [#allocation5], %s1051
        %s1053 = sand.u32 %s124, 1
        %s1054 = smul.addr %s1053, 64
        %s1055 = scalar_lea.vmem [#allocation9], %s1054
        %s1056 = sand.u32 %s150, 1
        %s1057 = scalar_lea.sflag [#allocation11], %s1056
        %s1058 = sand.u32 %s150, 1
        %s1059 = smul.addr %s1058, 2
        %s1060 = scalar_lea.vmem [#allocation10], %s1059
        // Predicated region
        $region49: #{tpu_custom_call.1} parent=35 // pred_check
          %p1061 = pneg %p134
        $region50: #{tpu_custom_call.1} parent=35 // pred_check_branch
          %1063 = sbr.rel (%p1061) target = $region52
        $region51: #{tpu_custom_call.1} parent=35 // pred_region
          %1065 = vsyncadd %s1052, 0
          %s1066 = smul.addr %s27, 8
          %s1067 = smul.addr %s1066, 8
          %s1068 = scalar_lea.hbm %s4, %s1067
          %s1069 = sshll.u32 %s1055, 4
          %s1070 = int_to_ptr.vmem [resolvable:$true] %s1069
          %s1071 = sshll.u32 %s1068, 4
          %s1072 = int_to_ptr.hbm [resolvable:$true] %s1071
          %1077 = dma.vmem_to_hbm [thread:$0]  %s1070, 1024, %s1072, %s1052, 128, 128, 8
        $region52: #{tpu_custom_call.1} parent=35 // pred_fallthru
          _
        // Predicated region
        $region53: #{tpu_custom_call.1} parent=35 // pred_check
          %p1078 = pneg %p160
        $region54: #{tpu_custom_call.1} parent=35 // pred_check_branch
          %1080 = sbr.rel (%p1078) target = $region56
        $region55: #{tpu_custom_call.1} parent=35 // pred_region
          %1082 = vsyncadd %s1057, 0
          %s1083 = smul.addr %s27, 2
          %s1084 = scalar_lea.hbm %s5, %s1083
          %s1086 = sshll.u32 %s1060, 4
          %s1087 = int_to_ptr.vmem [resolvable:$true] %s1086
          %s1088 = sshll.u32 %s1084, 4
          %s1089 = int_to_ptr.hbm [resolvable:$true] %s1088
          %1091 = dma.vmem_to_hbm [thread:$0]  %s1087, 32, %s1089, %s1057
        $region56: #{tpu_custom_call.1} parent=35 // pred_fallthru
          _
      $region36: #{tpu_custom_call.1} parent=5 // pred_fallthru
        _
      %p1092 = scmp.le.s32.totalorder 2, %s22
      // Predicated region
      $region57: #{tpu_custom_call.1} parent=5 // pred_check
        %p1093 = pneg %p1092
      $region58: #{tpu_custom_call.1} parent=5 // pred_check_branch
        %1095 = sbr.rel (%p1093) target = $region60
      $region59: #{tpu_custom_call.1} parent=5 // pred_region
        %s1096 = ssub.s32 %s22, 2
        // Predicated region
        $region61: #{tpu_custom_call.1} parent=59 // pred_check
          %p1097 = pneg %p140
        $region62: #{tpu_custom_call.1} parent=59 // pred_check_branch
          %1099 = sbr.rel (%p1097) target = $region64
        $region63: #{tpu_custom_call.1} parent=59 // pred_region
          %s1100 = sand.u32 %s125, 1
          %s1101 = scalar_lea.sflag [#allocation5], %s1100
          %s1102 = sand.u32 %s125, 1
          %s1103 = smul.addr %s1102, 64
          %s1104 = scalar_lea.vmem [#allocation9], %s1103
          %1106 = dma.done %s1101, 1024
        $region64: #{tpu_custom_call.1} parent=59 // pred_fallthru
          _
        // Predicated region
        $region65: #{tpu_custom_call.1} parent=59 // pred_check
          %p1107 = pneg %p166
        $region66: #{tpu_custom_call.1} parent=59 // pred_check_branch
          %1109 = sbr.rel (%p1107) target = $region68
        $region67: #{tpu_custom_call.1} parent=59 // pred_region
          %s1110 = sand.u32 %s151, 1
          %s1111 = scalar_lea.sflag [#allocation11], %s1110
          %s1112 = sand.u32 %s151, 1
          %s1113 = smul.addr %s1112, 2
          %s1114 = scalar_lea.vmem [#allocation10], %s1113
          %1116 = dma.done %s1111, 32
        $region68: #{tpu_custom_call.1} parent=59 // pred_fallthru
          _
      $region60: #{tpu_custom_call.1} parent=5 // pred_fallthru
        _
    $region6: #{tpu_custom_call.1} parent=1 // loop_footer
      %s26 = sadd.s32 1, %s22
    $region7: #{tpu_custom_call.1} parent=1 // loop_footer_branch
      %21 = sbr.rel target = $region3
    $region8: #{tpu_custom_call.1} parent=1 // loop_exit
      _
    %1117 = vsyncpa [#allocation4], 1
    %s1118 = scalar_lea.sflag [#allocation4], 1
    %1119 = vsyncpa %s1118, 1
    %1120 = vsyncpa [#allocation7], 1
    %1121 = vsyncpa [#allocation5], 1
    %s1122 = scalar_lea.sflag [#allocation5], 1
    %1123 = vsyncpa %s1122, 1
    %1124 = vsyncpa [#allocation11], 1
    %s1125 = scalar_lea.sflag [#allocation11], 1
    %1126 = vsyncpa %s1125, 1

</llo_original>
